<compile_context>
chip_gen: v7x
topology: tpu7x:2x2x1
jax: 0.10.0
libtpu: 0.0.40
codegen_flags: <defaults>
</compile_context>

<pallas_src>
import jax
import jax.numpy as jnp
from jax.experimental import pallas as pl
from jax.experimental.pallas import tpu as pltpu


def _make_kernel(num_layers, H, F, Fp, seq_len, horizons, B):
    """Build the kernel body (layer/seq/horizon counts are static)."""
    G = 4 * H

    def gates_to_hc(gates, c_l):
        # PyTorch gate order: i, f, g, o. Full-vreg activations (sigmoid + tanh on EUP),
        # then cheap lane slices to combine.
        sig = jax.nn.sigmoid(gates)
        th = jnp.tanh(gates)
        i_g = sig[:, 0 * H:1 * H]
        f_g = sig[:, 1 * H:2 * H]
        g_g = th[:, 2 * H:3 * H]
        o_g = sig[:, 3 * H:4 * H]
        c_new = f_g * c_l + i_g * g_g
        h_new = o_g * jnp.tanh(c_new)
        return h_new, c_new

    def cell_fused(x, h_l, c_l, w_cat, b_bc):
        # Single fused MXU push: [x, h] @ [W_x ; W_hh]  (bf16 operands, f32 acc).
        xh = jnp.concatenate([x, h_l], axis=-1).astype(jnp.bfloat16)
        gates = jnp.dot(xh, w_cat, preferred_element_type=jnp.float32) + b_bc
        return gates_to_hc(gates, c_l)

    def cell_precomp(p_t, h_l, c_l, w_hh):
        # Input projection (and bias) already precomputed off the chain; only the
        # recurrent matmul + one VALU add sit on the serial chain.
        gates = jnp.dot(h_l.astype(jnp.bfloat16), w_hh,
                        preferred_element_type=jnp.float32) + p_t
        return gates_to_hc(gates, c_l)

    def kernel(*refs):
        it = iter(refs)
        src_ref = next(it)                                           # (L*B, Fp) time-major
        enc0_wih_ref, enc0_whh_ref, enc0_b_ref = next(it), next(it), next(it)
        enc_hi_refs = [(next(it), next(it)) for _ in range(num_layers - 1)]
        dec0_wih_ref, dec0_whh_ref, dec0_b_ref = next(it), next(it), next(it)
        dec0_fold_w_ref, dec0_fold_b_ref = next(it), next(it)
        dec_hi_refs = [(next(it), next(it)) for _ in range(num_layers - 1)]
        fc4_w_ref, fc4_b_ref = next(it), next(it)
        out_ref = next(it)

        # ===================== encoder phase =====================
        # Hoisted encoder weight loads (decoder / fc4 weights are loaded only after
        # the encoder loop to bound concurrently-live vregs).
        enc0_whh = enc0_whh_ref[...]
        enc_hi = [(w_ref[...], jnp.broadcast_to(b_ref[...], (B, G)))
                  for (w_ref, b_ref) in enc_hi_refs]

        # Off-chain: layer-0 input projections for ALL source steps in ONE matmul
        # (bias folded in). Time-major rows => per-step slices are contiguous.
        src = src_ref[...]                                           # (L*B, Fp) f32
        p_enc = (jnp.dot(src.astype(jnp.bfloat16), enc0_wih_ref[...],
                         preferred_element_type=jnp.float32)
                 + jnp.broadcast_to(enc0_b_ref[...], (seq_len * B, G)))

        h = [jnp.zeros((B, H), jnp.float32) for _ in range(num_layers)]
        c = [jnp.zeros((B, H), jnp.float32) for _ in range(num_layers)]

        for t in range(seq_len):
            h[0], c[0] = cell_precomp(p_enc[t * B:(t + 1) * B, :], h[0], c[0], enc0_whh)
            x = h[0]
            for l in range(1, num_layers):
                h[l], c[l] = cell_fused(x, h[l], c[l], *enc_hi[l - 1])
                x = h[l]

        # ===================== decoder phase =====================
        dec0_whh = dec0_whh_ref[...]
        dec0_fold_w = dec0_fold_w_ref[...]
        dec0_fold_b = jnp.broadcast_to(dec0_fold_b_ref[...], (B, G))
        dec_hi = [(w_ref[...], jnp.broadcast_to(b_ref[...], (B, G)))
                  for (w_ref, b_ref) in dec_hi_refs]

        # Off-chain: decoder step-0 layer-0 input projection from the last source step.
        src_last = src[(seq_len - 1) * B:seq_len * B, :]             # (B, Fp)
        p_dec0 = (jnp.dot(src_last.astype(jnp.bfloat16), dec0_wih_ref[...],
                          preferred_element_type=jnp.float32)
                  + jnp.broadcast_to(dec0_b_ref[...], (B, G)))

        h_tops = []
        for t in range(horizons):
            if t == 0:
                h[0], c[0] = cell_precomp(p_dec0, h[0], c[0], dec0_whh)
            else:
                # fc4 folded into the layer-0 input projection: feed the previous
                # top-layer hidden state straight back (no fc4 on the chain).
                h[0], c[0] = cell_fused(h_tops[-1], h[0], c[0], dec0_fold_w, dec0_fold_b)
            x = h[0]
            for l in range(1, num_layers):
                h[l], c[l] = cell_fused(x, h[l], c[l], *dec_hi[l - 1])
                x = h[l]
            h_tops.append(h[num_layers - 1])

        # ============== fc4 head: ONE batched matmul, off the serial chain ==============
        h_stack = jnp.concatenate(h_tops, axis=0).astype(jnp.bfloat16)   # (horizons*B, H)
        out = (jnp.dot(h_stack, fc4_w_ref[...], preferred_element_type=jnp.float32)
               + jnp.broadcast_to(fc4_b_ref[...], (horizons * B, F)))
        out_ref[...] = out.astype(out_ref.dtype)

        # TODO(synk): the train=True teacher-forcing branch (random.random() < 0.4)
        #             and the fc1 / out_1 head are not used by the inference output
        #             and are omitted.

    return kernel


def lstm_seq2seq_forward(src, params, horizons):
    B, L, F = src.shape
    num_layers = len(params["enc"])
    H = params["enc"][0][1].shape[1]                 # W_hh is (4H, H)
    G = 4 * H
    Fp = ((F + 15) // 16) * 16                       # pad features (bf16 sublane packing)

    f32, bf16 = jnp.float32, jnp.bfloat16

    # Time-major, feature-padded source: rows of step t are [t*B, (t+1)*B).
    src_tm = (jnp.zeros((L, B, Fp), f32)
              .at[:, :, :F].set(jnp.transpose(src.astype(f32), (1, 0, 2)))
              .reshape(L * B, Fp))

    def pad_ih(w_ih):                                # (4H, F) -> (Fp, 4H), zero-padded rows
        return jnp.zeros((Fp, G), f32).at[:w_ih.shape[1], :].set(w_ih.T)

    def cat_hi(w_ih, w_hh):                          # layers >= 1: (2H, 4H)
        return jnp.concatenate([w_ih.T, w_hh.T], axis=0)

    def bias(b_ih, b_hh):
        return (b_ih + b_hh).reshape(1, G).astype(f32)

    inputs = [src_tm]

    # --- encoder ---
    w_ih0e, w_hh0e, b_ih0e, b_hh0e = params["enc"][0]
    inputs += [pad_ih(w_ih0e).astype(bf16), w_hh0e.T.astype(bf16), bias(b_ih0e, b_hh0e)]
    for l in range(1, num_layers):
        w_ih, w_hh, b_ih, b_hh = params["enc"][l]
        inputs += [cat_hi(w_ih, w_hh).astype(bf16), bias(b_ih, b_hh)]

    # --- decoder layer 0: step-0 split (precompute) + folded fc4 feedback (t >= 1) ---
    w_ih0d, w_hh0d, b_ih0d, b_hh0d = params["dec"][0]
    fc4_w, fc4_b = params["fc4_w"], params["fc4_b"]                  # (F, H), (F,)
    inputs += [pad_ih(w_ih0d).astype(bf16), w_hh0d.T.astype(bf16), bias(b_ih0d, b_hh0d)]
    # Fold fc4 into the layer-0 input projection (f32 offline, single bf16 cast):
    #   x_t @ W_ih^T = h_top @ (fc4_w^T @ W_ih^T) + fc4_b @ W_ih^T
    w_fold = fc4_w.T.astype(f32) @ w_ih0d.T.astype(f32)              # (H, 4H)
    b_fold = bias(b_ih0d, b_hh0d) + fc4_b.reshape(1, F).astype(f32) @ w_ih0d.T.astype(f32)
    inputs += [jnp.concatenate([w_fold, w_hh0d.T.astype(f32)], axis=0).astype(bf16),
               b_fold.astype(f32)]
    for l in range(1, num_layers):
        w_ih, w_hh, b_ih, b_hh = params["dec"][l]
        inputs += [cat_hi(w_ih, w_hh).astype(bf16), bias(b_ih, b_hh)]

    # --- fc4 head (bf16 operands; applied once, off the serial chain) ---
    inputs += [fc4_w.T.astype(bf16), fc4_b.reshape(1, F).astype(f32)]

    kernel = _make_kernel(num_layers, H, F, Fp, L, horizons, B)
    out_tm = pl.pallas_call(
        kernel,
        out_shape=jax.ShapeDtypeStruct((horizons * B, F), jnp.float32),
        in_specs=[pl.BlockSpec(memory_space=pltpu.MemorySpace.VMEM) for _ in inputs],
        out_specs=pl.BlockSpec(memory_space=pltpu.MemorySpace.VMEM),
    )(*inputs)
    # (horizons*B, F) time-major -> (B, horizons, F)
    return out_tm.reshape(horizons, B, F).transpose(1, 0, 2)


def init_params(key, H, F, num_layers):
    """Deterministic PyTorch-style init: U(-1/sqrt(H), 1/sqrt(H)); raw torch layout."""
    keys = iter(jax.random.split(key, 8 * num_layers + 2))
    bound = 1.0 / (H ** 0.5)

    def u(shape):
        return jax.random.uniform(next(keys), shape, jnp.float32, -bound, bound)

    def lstm_stack():
        layers = []
        for l in range(num_layers):
            in_dim = F if l == 0 else H
            layers.append((u((4 * H, in_dim)), u((4 * H, H)), u((4 * H,)), u((4 * H,))))
        return layers

    return {"enc": lstm_stack(), "dec": lstm_stack(),
            "fc4_w": u((F, H)), "fc4_b": u((F,))}


def reference_forward(src, params, horizons):
    """Pure-f32 JAX reference with the PyTorch module's semantics."""
    B = src.shape[0]
    num_layers = len(params["enc"])
    H = params["enc"][0][1].shape[1]

    def cell(x, h_l, c_l, layer):
        w_ih, w_hh, b_ih, b_hh = layer
        gates = x @ w_ih.T + h_l @ w_hh.T + b_ih + b_hh
        i = jax.nn.sigmoid(gates[:, :H])
        f = jax.nn.sigmoid(gates[:, H:2 * H])
        g = jnp.tanh(gates[:, 2 * H:3 * H])
        o = jax.nn.sigmoid(gates[:, 3 * H:])
        c_new = f * c_l + i * g
        return o * jnp.tanh(c_new), c_new

    h = [jnp.zeros((B, H), jnp.float32) for _ in range(num_layers)]
    c = [jnp.zeros((B, H), jnp.float32) for _ in range(num_layers)]
    for t in range(src.shape[1]):
        x = src[:, t, :]
        for l in range(num_layers):
            h[l], c[l] = cell(x, h[l], c[l], params["enc"][l])
            x = h[l]

    outs = []
    x_in = src[:, -1, :]
    for _ in range(horizons):
        x = x_in
        for l in range(num_layers):
            h[l], c[l] = cell(x, h[l], c[l], params["dec"][l])
            x = h[l]
        out4 = h[-1] @ params["fc4_w"].T + params["fc4_b"]
        outs.append(out4)
        x_in = out4
    return jnp.stack(outs, axis=1)


if __name__ == "__main__":
    # configs: d_model=32, layer_dim=2, seq_len=8, pred_len=4, enc_in=4
    B, L, horizons, F, H, num_layers = 2, 8, 4, 4, 32, 2

    key = jax.random.PRNGKey(0)
    k_src, k_par = jax.random.split(key)
    src = jax.random.normal(k_src, (B, L, F), jnp.float32)
    params = init_params(k_par, H, F, num_layers)

    out = lstm_seq2seq_forward(src, params, horizons)
    out = jax.block_until_ready(out)

    ref = reference_forward(src, params, horizons)
    assert out.shape == (B, horizons, F)
    # Kernel uses bf16 MXU operands (f32 accumulation / f32 state) plus an offline
    # fc4-fold, vs. a pure-f32 reference; allow small mixed-precision drift over
    # the 12 recurrent steps.
    assert jnp.allclose(out, ref, rtol=5e-2, atol=5e-2), "Pallas output mismatch vs reference"
    print("KERNEL_OK")
</pallas_src>

<mosaic_0001>
module attributes {stable_mosaic.version = 11 : i64} {
  func.func @kernel(%arg0: memref<16x16xf32, #tpu.memory_space<vmem>>, %arg1: memref<16x128xbf16, #tpu.memory_space<vmem>>, %arg2: memref<32x128xbf16, #tpu.memory_space<vmem>>, %arg3: memref<1x128xf32, #tpu.memory_space<vmem>>, %arg4: memref<64x128xbf16, #tpu.memory_space<vmem>>, %arg5: memref<1x128xf32, #tpu.memory_space<vmem>>, %arg6: memref<16x128xbf16, #tpu.memory_space<vmem>>, %arg7: memref<32x128xbf16, #tpu.memory_space<vmem>>, %arg8: memref<1x128xf32, #tpu.memory_space<vmem>>, %arg9: memref<64x128xbf16, #tpu.memory_space<vmem>>, %arg10: memref<1x128xf32, #tpu.memory_space<vmem>>, %arg11: memref<64x128xbf16, #tpu.memory_space<vmem>>, %arg12: memref<1x128xf32, #tpu.memory_space<vmem>>, %arg13: memref<32x4xbf16, #tpu.memory_space<vmem>>, %arg14: memref<1x4xf32, #tpu.memory_space<vmem>>, %arg15: memref<8x4xf32, #tpu.memory_space<vmem>>) attributes {dimension_semantics = [], scalar_prefetch = 0 : i64, scratch_operands = 0 : i64, tpu.core_type = #tpu.core_type<tc>} {
    %c0 = arith.constant 0 : index
    %c0_0 = arith.constant 0 : index
    %0 = vector.load %arg2[%c0, %c0_0] : memref<32x128xbf16, #tpu.memory_space<vmem>>, vector<32x128xbf16>
    %c0_1 = arith.constant 0 : index
    %c0_2 = arith.constant 0 : index
    %1 = vector.load %arg4[%c0_1, %c0_2] : memref<64x128xbf16, #tpu.memory_space<vmem>>, vector<64x128xbf16>
    %c0_3 = arith.constant 0 : index
    %c0_4 = arith.constant 0 : index
    %2 = vector.load %arg5[%c0_3, %c0_4] : memref<1x128xf32, #tpu.memory_space<vmem>>, vector<1x128xf32>
    %3 = vector.shape_cast %2 : vector<1x128xf32> to vector<1x128xf32>
    %4 = vector.broadcast %3 : vector<1x128xf32> to vector<2x128xf32>
    %c0_5 = arith.constant 0 : index
    %c0_6 = arith.constant 0 : index
    %5 = vector.load %arg0[%c0_5, %c0_6] : memref<16x16xf32, #tpu.memory_space<vmem>>, vector<16x16xf32>
    %6 = arith.truncf %5 : vector<16x16xf32> to vector<16x16xbf16>
    %c0_7 = arith.constant 0 : index
    %c0_8 = arith.constant 0 : index
    %7 = vector.load %arg1[%c0_7, %c0_8] : memref<16x128xbf16, #tpu.memory_space<vmem>>, vector<16x128xbf16>
    %cst = arith.constant dense<0.000000e+00> : vector<16x128xf32>
    %8 = tpu.matmul %6, %7, %cst {dimension_numbers = #tpu.dot_dimension_numbers<[1], [0], [0], [1], [0, 0, 1, 1], [], []>} : vector<16x16xbf16>, vector<16x128xbf16>, vector<16x128xf32> -> vector<16x128xf32>
    %c0_9 = arith.constant 0 : index
    %c0_10 = arith.constant 0 : index
    %9 = vector.load %arg3[%c0_9, %c0_10] : memref<1x128xf32, #tpu.memory_space<vmem>>, vector<1x128xf32>
    %10 = vector.shape_cast %9 : vector<1x128xf32> to vector<1x128xf32>
    %11 = vector.broadcast %10 : vector<1x128xf32> to vector<16x128xf32>
    %12 = arith.addf %8, %11 : vector<16x128xf32>
    %cst_11 = arith.constant 0.000000e+00 : f32
    %13 = vector.broadcast %cst_11 : f32 to vector<2x32xf32>
    %cst_12 = arith.constant 0.000000e+00 : f32
    %14 = vector.broadcast %cst_12 : f32 to vector<2x32xf32>
    %cst_13 = arith.constant 0.000000e+00 : f32
    %15 = vector.broadcast %cst_13 : f32 to vector<2x32xf32>
    %cst_14 = arith.constant 0.000000e+00 : f32
    %16 = vector.broadcast %cst_14 : f32 to vector<2x32xf32>
    %17 = vector.extract_strided_slice %12 {offsets = [0, 0], sizes = [2, 128], strides = [1, 1]} : vector<16x128xf32> to vector<2x128xf32>
    %18 = arith.truncf %13 : vector<2x32xf32> to vector<2x32xbf16>
    %cst_15 = arith.constant dense<0.000000e+00> : vector<2x128xf32>
    %19 = tpu.matmul %18, %0, %cst_15 {dimension_numbers = #tpu.dot_dimension_numbers<[1], [0], [0], [1], [0, 0, 1, 1], [], []>} : vector<2x32xbf16>, vector<32x128xbf16>, vector<2x128xf32> -> vector<2x128xf32>
    %20 = arith.addf %19, %17 : vector<2x128xf32>
    %21 = arith.negf %20 : vector<2x128xf32>
    %22 = math.exp %21 : vector<2x128xf32>
    %cst_16 = arith.constant 1.000000e+00 : f32
    %23 = vector.broadcast %cst_16 : f32 to vector<2x128xf32>
    %24 = arith.addf %23, %22 : vector<2x128xf32>
    %25 = arith.divf %23, %24 : vector<2x128xf32>
    %26 = math.tanh %20 : vector<2x128xf32>
    %27 = vector.extract_strided_slice %25 {offsets = [0, 0], sizes = [2, 32], strides = [1, 1]} : vector<2x128xf32> to vector<2x32xf32>
    %28 = vector.extract_strided_slice %25 {offsets = [0, 32], sizes = [2, 32], strides = [1, 1]} : vector<2x128xf32> to vector<2x32xf32>
    %29 = vector.extract_strided_slice %26 {offsets = [0, 64], sizes = [2, 32], strides = [1, 1]} : vector<2x128xf32> to vector<2x32xf32>
    %30 = vector.extract_strided_slice %25 {offsets = [0, 96], sizes = [2, 32], strides = [1, 1]} : vector<2x128xf32> to vector<2x32xf32>
    %31 = arith.mulf %28, %15 : vector<2x32xf32>
    %32 = arith.mulf %27, %29 : vector<2x32xf32>
    %33 = arith.addf %31, %32 : vector<2x32xf32>
    %34 = math.tanh %33 : vector<2x32xf32>
    %35 = arith.mulf %30, %34 : vector<2x32xf32>
    %36 = tpu.concatenate %35, %14 in 1 : vector<2x32xf32>, vector<2x32xf32> -> vector<2x64xf32>
    %37 = arith.truncf %36 : vector<2x64xf32> to vector<2x64xbf16>
    %cst_17 = arith.constant dense<0.000000e+00> : vector<2x128xf32>
    %38 = tpu.matmul %37, %1, %cst_17 {dimension_numbers = #tpu.dot_dimension_numbers<[1], [0], [0], [1], [0, 0, 1, 1], [], []>} : vector<2x64xbf16>, vector<64x128xbf16>, vector<2x128xf32> -> vector<2x128xf32>
    %39 = arith.addf %38, %4 : vector<2x128xf32>
    %40 = arith.negf %39 : vector<2x128xf32>
    %41 = math.exp %40 : vector<2x128xf32>
    %cst_18 = arith.constant 1.000000e+00 : f32
    %42 = vector.broadcast %cst_18 : f32 to vector<2x128xf32>
    %43 = arith.addf %42, %41 : vector<2x128xf32>
    %44 = arith.divf %42, %43 : vector<2x128xf32>
    %45 = math.tanh %39 : vector<2x128xf32>
    %46 = vector.extract_strided_slice %44 {offsets = [0, 0], sizes = [2, 32], strides = [1, 1]} : vector<2x128xf32> to vector<2x32xf32>
    %47 = vector.extract_strided_slice %44 {offsets = [0, 32], sizes = [2, 32], strides = [1, 1]} : vector<2x128xf32> to vector<2x32xf32>
    %48 = vector.extract_strided_slice %45 {offsets = [0, 64], sizes = [2, 32], strides = [1, 1]} : vector<2x128xf32> to vector<2x32xf32>
    %49 = vector.extract_strided_slice %44 {offsets = [0, 96], sizes = [2, 32], strides = [1, 1]} : vector<2x128xf32> to vector<2x32xf32>
    %50 = arith.mulf %47, %16 : vector<2x32xf32>
    %51 = arith.mulf %46, %48 : vector<2x32xf32>
    %52 = arith.addf %50, %51 : vector<2x32xf32>
    %53 = math.tanh %52 : vector<2x32xf32>
    %54 = arith.mulf %49, %53 : vector<2x32xf32>
    %55 = vector.extract_strided_slice %12 {offsets = [2, 0], sizes = [2, 128], strides = [1, 1]} : vector<16x128xf32> to vector<2x128xf32>
    %56 = arith.truncf %35 : vector<2x32xf32> to vector<2x32xbf16>
    %cst_19 = arith.constant dense<0.000000e+00> : vector<2x128xf32>
    %57 = tpu.matmul %56, %0, %cst_19 {dimension_numbers = #tpu.dot_dimension_numbers<[1], [0], [0], [1], [0, 0, 1, 1], [], []>} : vector<2x32xbf16>, vector<32x128xbf16>, vector<2x128xf32> -> vector<2x128xf32>
    %58 = arith.addf %57, %55 : vector<2x128xf32>
    %59 = arith.negf %58 : vector<2x128xf32>
    %60 = math.exp %59 : vector<2x128xf32>
    %cst_20 = arith.constant 1.000000e+00 : f32
    %61 = vector.broadcast %cst_20 : f32 to vector<2x128xf32>
    %62 = arith.addf %61, %60 : vector<2x128xf32>
    %63 = arith.divf %61, %62 : vector<2x128xf32>
    %64 = math.tanh %58 : vector<2x128xf32>
    %65 = vector.extract_strided_slice %63 {offsets = [0, 0], sizes = [2, 32], strides = [1, 1]} : vector<2x128xf32> to vector<2x32xf32>
    %66 = vector.extract_strided_slice %63 {offsets = [0, 32], sizes = [2, 32], strides = [1, 1]} : vector<2x128xf32> to vector<2x32xf32>
    %67 = vector.extract_strided_slice %64 {offsets = [0, 64], sizes = [2, 32], strides = [1, 1]} : vector<2x128xf32> to vector<2x32xf32>
    %68 = vector.extract_strided_slice %63 {offsets = [0, 96], sizes = [2, 32], strides = [1, 1]} : vector<2x128xf32> to vector<2x32xf32>
    %69 = arith.mulf %66, %33 : vector<2x32xf32>
    %70 = arith.mulf %65, %67 : vector<2x32xf32>
    %71 = arith.addf %69, %70 : vector<2x32xf32>
    %72 = math.tanh %71 : vector<2x32xf32>
    %73 = arith.mulf %68, %72 : vector<2x32xf32>
    %74 = tpu.concatenate %73, %54 in 1 : vector<2x32xf32>, vector<2x32xf32> -> vector<2x64xf32>
    %75 = arith.truncf %74 : vector<2x64xf32> to vector<2x64xbf16>
    %cst_21 = arith.constant dense<0.000000e+00> : vector<2x128xf32>
    %76 = tpu.matmul %75, %1, %cst_21 {dimension_numbers = #tpu.dot_dimension_numbers<[1], [0], [0], [1], [0, 0, 1, 1], [], []>} : vector<2x64xbf16>, vector<64x128xbf16>, vector<2x128xf32> -> vector<2x128xf32>
    %77 = arith.addf %76, %4 : vector<2x128xf32>
    %78 = arith.negf %77 : vector<2x128xf32>
    %79 = math.exp %78 : vector<2x128xf32>
    %cst_22 = arith.constant 1.000000e+00 : f32
    %80 = vector.broadcast %cst_22 : f32 to vector<2x128xf32>
    %81 = arith.addf %80, %79 : vector<2x128xf32>
    %82 = arith.divf %80, %81 : vector<2x128xf32>
    %83 = math.tanh %77 : vector<2x128xf32>
    %84 = vector.extract_strided_slice %82 {offsets = [0, 0], sizes = [2, 32], strides = [1, 1]} : vector<2x128xf32> to vector<2x32xf32>
    %85 = vector.extract_strided_slice %82 {offsets = [0, 32], sizes = [2, 32], strides = [1, 1]} : vector<2x128xf32> to vector<2x32xf32>
    %86 = vector.extract_strided_slice %83 {offsets = [0, 64], sizes = [2, 32], strides = [1, 1]} : vector<2x128xf32> to vector<2x32xf32>
    %87 = vector.extract_strided_slice %82 {offsets = [0, 96], sizes = [2, 32], strides = [1, 1]} : vector<2x128xf32> to vector<2x32xf32>
    %88 = arith.mulf %85, %52 : vector<2x32xf32>
    %89 = arith.mulf %84, %86 : vector<2x32xf32>
    %90 = arith.addf %88, %89 : vector<2x32xf32>
    %91 = math.tanh %90 : vector<2x32xf32>
    %92 = arith.mulf %87, %91 : vector<2x32xf32>
    %93 = vector.extract_strided_slice %12 {offsets = [4, 0], sizes = [2, 128], strides = [1, 1]} : vector<16x128xf32> to vector<2x128xf32>
    %94 = arith.truncf %73 : vector<2x32xf32> to vector<2x32xbf16>
    %cst_23 = arith.constant dense<0.000000e+00> : vector<2x128xf32>
    %95 = tpu.matmul %94, %0, %cst_23 {dimension_numbers = #tpu.dot_dimension_numbers<[1], [0], [0], [1], [0, 0, 1, 1], [], []>} : vector<2x32xbf16>, vector<32x128xbf16>, vector<2x128xf32> -> vector<2x128xf32>
    %96 = arith.addf %95, %93 : vector<2x128xf32>
    %97 = arith.negf %96 : vector<2x128xf32>
    %98 = math.exp %97 : vector<2x128xf32>
    %cst_24 = arith.constant 1.000000e+00 : f32
    %99 = vector.broadcast %cst_24 : f32 to vector<2x128xf32>
    %100 = arith.addf %99, %98 : vector<2x128xf32>
    %101 = arith.divf %99, %100 : vector<2x128xf32>
    %102 = math.tanh %96 : vector<2x128xf32>
    %103 = vector.extract_strided_slice %101 {offsets = [0, 0], sizes = [2, 32], strides = [1, 1]} : vector<2x128xf32> to vector<2x32xf32>
    %104 = vector.extract_strided_slice %101 {offsets = [0, 32], sizes = [2, 32], strides = [1, 1]} : vector<2x128xf32> to vector<2x32xf32>
    %105 = vector.extract_strided_slice %102 {offsets = [0, 64], sizes = [2, 32], strides = [1, 1]} : vector<2x128xf32> to vector<2x32xf32>
    %106 = vector.extract_strided_slice %101 {offsets = [0, 96], sizes = [2, 32], strides = [1, 1]} : vector<2x128xf32> to vector<2x32xf32>
    %107 = arith.mulf %104, %71 : vector<2x32xf32>
    %108 = arith.mulf %103, %105 : vector<2x32xf32>
    %109 = arith.addf %107, %108 : vector<2x32xf32>
    %110 = math.tanh %109 : vector<2x32xf32>
    %111 = arith.mulf %106, %110 : vector<2x32xf32>
    %112 = tpu.concatenate %111, %92 in 1 : vector<2x32xf32>, vector<2x32xf32> -> vector<2x64xf32>
    %113 = arith.truncf %112 : vector<2x64xf32> to vector<2x64xbf16>
    %cst_25 = arith.constant dense<0.000000e+00> : vector<2x128xf32>
    %114 = tpu.matmul %113, %1, %cst_25 {dimension_numbers = #tpu.dot_dimension_numbers<[1], [0], [0], [1], [0, 0, 1, 1], [], []>} : vector<2x64xbf16>, vector<64x128xbf16>, vector<2x128xf32> -> vector<2x128xf32>
    %115 = arith.addf %114, %4 : vector<2x128xf32>
    %116 = arith.negf %115 : vector<2x128xf32>
    %117 = math.exp %116 : vector<2x128xf32>
    %cst_26 = arith.constant 1.000000e+00 : f32
    %118 = vector.broadcast %cst_26 : f32 to vector<2x128xf32>
    %119 = arith.addf %118, %117 : vector<2x128xf32>
    %120 = arith.divf %118, %119 : vector<2x128xf32>
    %121 = math.tanh %115 : vector<2x128xf32>
    %122 = vector.extract_strided_slice %120 {offsets = [0, 0], sizes = [2, 32], strides = [1, 1]} : vector<2x128xf32> to vector<2x32xf32>
    %123 = vector.extract_strided_slice %120 {offsets = [0, 32], sizes = [2, 32], strides = [1, 1]} : vector<2x128xf32> to vector<2x32xf32>
    %124 = vector.extract_strided_slice %121 {offsets = [0, 64], sizes = [2, 32], strides = [1, 1]} : vector<2x128xf32> to vector<2x32xf32>
    %125 = vector.extract_strided_slice %120 {offsets = [0, 96], sizes = [2, 32], strides = [1, 1]} : vector<2x128xf32> to vector<2x32xf32>
    %126 = arith.mulf %123, %90 : vector<2x32xf32>
    %127 = arith.mulf %122, %124 : vector<2x32xf32>
    %128 = arith.addf %126, %127 : vector<2x32xf32>
    %129 = math.tanh %128 : vector<2x32xf32>
    %130 = arith.mulf %125, %129 : vector<2x32xf32>
    %131 = vector.extract_strided_slice %12 {offsets = [6, 0], sizes = [2, 128], strides = [1, 1]} : vector<16x128xf32> to vector<2x128xf32>
    %132 = arith.truncf %111 : vector<2x32xf32> to vector<2x32xbf16>
    %cst_27 = arith.constant dense<0.000000e+00> : vector<2x128xf32>
    %133 = tpu.matmul %132, %0, %cst_27 {dimension_numbers = #tpu.dot_dimension_numbers<[1], [0], [0], [1], [0, 0, 1, 1], [], []>} : vector<2x32xbf16>, vector<32x128xbf16>, vector<2x128xf32> -> vector<2x128xf32>
    %134 = arith.addf %133, %131 : vector<2x128xf32>
    %135 = arith.negf %134 : vector<2x128xf32>
    %136 = math.exp %135 : vector<2x128xf32>
    %cst_28 = arith.constant 1.000000e+00 : f32
    %137 = vector.broadcast %cst_28 : f32 to vector<2x128xf32>
    %138 = arith.addf %137, %136 : vector<2x128xf32>
    %139 = arith.divf %137, %138 : vector<2x128xf32>
    %140 = math.tanh %134 : vector<2x128xf32>
    %141 = vector.extract_strided_slice %139 {offsets = [0, 0], sizes = [2, 32], strides = [1, 1]} : vector<2x128xf32> to vector<2x32xf32>
    %142 = vector.extract_strided_slice %139 {offsets = [0, 32], sizes = [2, 32], strides = [1, 1]} : vector<2x128xf32> to vector<2x32xf32>
    %143 = vector.extract_strided_slice %140 {offsets = [0, 64], sizes = [2, 32], strides = [1, 1]} : vector<2x128xf32> to vector<2x32xf32>
    %144 = vector.extract_strided_slice %139 {offsets = [0, 96], sizes = [2, 32], strides = [1, 1]} : vector<2x128xf32> to vector<2x32xf32>
    %145 = arith.mulf %142, %109 : vector<2x32xf32>
    %146 = arith.mulf %141, %143 : vector<2x32xf32>
    %147 = arith.addf %145, %146 : vector<2x32xf32>
    %148 = math.tanh %147 : vector<2x32xf32>
    %149 = arith.mulf %144, %148 : vector<2x32xf32>
    %150 = tpu.concatenate %149, %130 in 1 : vector<2x32xf32>, vector<2x32xf32> -> vector<2x64xf32>
    %151 = arith.truncf %150 : vector<2x64xf32> to vector<2x64xbf16>
    %cst_29 = arith.constant dense<0.000000e+00> : vector<2x128xf32>
    %152 = tpu.matmul %151, %1, %cst_29 {dimension_numbers = #tpu.dot_dimension_numbers<[1], [0], [0], [1], [0, 0, 1, 1], [], []>} : vector<2x64xbf16>, vector<64x128xbf16>, vector<2x128xf32> -> vector<2x128xf32>
    %153 = arith.addf %152, %4 : vector<2x128xf32>
    %154 = arith.negf %153 : vector<2x128xf32>
    %155 = math.exp %154 : vector<2x128xf32>
    %cst_30 = arith.constant 1.000000e+00 : f32
    %156 = vector.broadcast %cst_30 : f32 to vector<2x128xf32>
    %157 = arith.addf %156, %155 : vector<2x128xf32>
    %158 = arith.divf %156, %157 : vector<2x128xf32>
    %159 = math.tanh %153 : vector<2x128xf32>
    %160 = vector.extract_strided_slice %158 {offsets = [0, 0], sizes = [2, 32], strides = [1, 1]} : vector<2x128xf32> to vector<2x32xf32>
    %161 = vector.extract_strided_slice %158 {offsets = [0, 32], sizes = [2, 32], strides = [1, 1]} : vector<2x128xf32> to vector<2x32xf32>
    %162 = vector.extract_strided_slice %159 {offsets = [0, 64], sizes = [2, 32], strides = [1, 1]} : vector<2x128xf32> to vector<2x32xf32>
    %163 = vector.extract_strided_slice %158 {offsets = [0, 96], sizes = [2, 32], strides = [1, 1]} : vector<2x128xf32> to vector<2x32xf32>
    %164 = arith.mulf %161, %128 : vector<2x32xf32>
    %165 = arith.mulf %160, %162 : vector<2x32xf32>
    %166 = arith.addf %164, %165 : vector<2x32xf32>
    %167 = math.tanh %166 : vector<2x32xf32>
    %168 = arith.mulf %163, %167 : vector<2x32xf32>
    %169 = vector.extract_strided_slice %12 {offsets = [8, 0], sizes = [2, 128], strides = [1, 1]} : vector<16x128xf32> to vector<2x128xf32>
    %170 = arith.truncf %149 : vector<2x32xf32> to vector<2x32xbf16>
    %cst_31 = arith.constant dense<0.000000e+00> : vector<2x128xf32>
    %171 = tpu.matmul %170, %0, %cst_31 {dimension_numbers = #tpu.dot_dimension_numbers<[1], [0], [0], [1], [0, 0, 1, 1], [], []>} : vector<2x32xbf16>, vector<32x128xbf16>, vector<2x128xf32> -> vector<2x128xf32>
    %172 = arith.addf %171, %169 : vector<2x128xf32>
    %173 = arith.negf %172 : vector<2x128xf32>
    %174 = math.exp %173 : vector<2x128xf32>
    %cst_32 = arith.constant 1.000000e+00 : f32
    %175 = vector.broadcast %cst_32 : f32 to vector<2x128xf32>
    %176 = arith.addf %175, %174 : vector<2x128xf32>
    %177 = arith.divf %175, %176 : vector<2x128xf32>
    %178 = math.tanh %172 : vector<2x128xf32>
    %179 = vector.extract_strided_slice %177 {offsets = [0, 0], sizes = [2, 32], strides = [1, 1]} : vector<2x128xf32> to vector<2x32xf32>
    %180 = vector.extract_strided_slice %177 {offsets = [0, 32], sizes = [2, 32], strides = [1, 1]} : vector<2x128xf32> to vector<2x32xf32>
    %181 = vector.extract_strided_slice %178 {offsets = [0, 64], sizes = [2, 32], strides = [1, 1]} : vector<2x128xf32> to vector<2x32xf32>
    %182 = vector.extract_strided_slice %177 {offsets = [0, 96], sizes = [2, 32], strides = [1, 1]} : vector<2x128xf32> to vector<2x32xf32>
    %183 = arith.mulf %180, %147 : vector<2x32xf32>
    %184 = arith.mulf %179, %181 : vector<2x32xf32>
    %185 = arith.addf %183, %184 : vector<2x32xf32>
    %186 = math.tanh %185 : vector<2x32xf32>
    %187 = arith.mulf %182, %186 : vector<2x32xf32>
    %188 = tpu.concatenate %187, %168 in 1 : vector<2x32xf32>, vector<2x32xf32> -> vector<2x64xf32>
    %189 = arith.truncf %188 : vector<2x64xf32> to vector<2x64xbf16>
    %cst_33 = arith.constant dense<0.000000e+00> : vector<2x128xf32>
    %190 = tpu.matmul %189, %1, %cst_33 {dimension_numbers = #tpu.dot_dimension_numbers<[1], [0], [0], [1], [0, 0, 1, 1], [], []>} : vector<2x64xbf16>, vector<64x128xbf16>, vector<2x128xf32> -> vector<2x128xf32>
    %191 = arith.addf %190, %4 : vector<2x128xf32>
    %192 = arith.negf %191 : vector<2x128xf32>
    %193 = math.exp %192 : vector<2x128xf32>
    %cst_34 = arith.constant 1.000000e+00 : f32
    %194 = vector.broadcast %cst_34 : f32 to vector<2x128xf32>
    %195 = arith.addf %194, %193 : vector<2x128xf32>
    %196 = arith.divf %194, %195 : vector<2x128xf32>
    %197 = math.tanh %191 : vector<2x128xf32>
    %198 = vector.extract_strided_slice %196 {offsets = [0, 0], sizes = [2, 32], strides = [1, 1]} : vector<2x128xf32> to vector<2x32xf32>
    %199 = vector.extract_strided_slice %196 {offsets = [0, 32], sizes = [2, 32], strides = [1, 1]} : vector<2x128xf32> to vector<2x32xf32>
    %200 = vector.extract_strided_slice %197 {offsets = [0, 64], sizes = [2, 32], strides = [1, 1]} : vector<2x128xf32> to vector<2x32xf32>
    %201 = vector.extract_strided_slice %196 {offsets = [0, 96], sizes = [2, 32], strides = [1, 1]} : vector<2x128xf32> to vector<2x32xf32>
    %202 = arith.mulf %199, %166 : vector<2x32xf32>
    %203 = arith.mulf %198, %200 : vector<2x32xf32>
    %204 = arith.addf %202, %203 : vector<2x32xf32>
    %205 = math.tanh %204 : vector<2x32xf32>
    %206 = arith.mulf %201, %205 : vector<2x32xf32>
    %207 = vector.extract_strided_slice %12 {offsets = [10, 0], sizes = [2, 128], strides = [1, 1]} : vector<16x128xf32> to vector<2x128xf32>
    %208 = arith.truncf %187 : vector<2x32xf32> to vector<2x32xbf16>
    %cst_35 = arith.constant dense<0.000000e+00> : vector<2x128xf32>
    %209 = tpu.matmul %208, %0, %cst_35 {dimension_numbers = #tpu.dot_dimension_numbers<[1], [0], [0], [1], [0, 0, 1, 1], [], []>} : vector<2x32xbf16>, vector<32x128xbf16>, vector<2x128xf32> -> vector<2x128xf32>
    %210 = arith.addf %209, %207 : vector<2x128xf32>
    %211 = arith.negf %210 : vector<2x128xf32>
    %212 = math.exp %211 : vector<2x128xf32>
    %cst_36 = arith.constant 1.000000e+00 : f32
    %213 = vector.broadcast %cst_36 : f32 to vector<2x128xf32>
    %214 = arith.addf %213, %212 : vector<2x128xf32>
    %215 = arith.divf %213, %214 : vector<2x128xf32>
    %216 = math.tanh %210 : vector<2x128xf32>
    %217 = vector.extract_strided_slice %215 {offsets = [0, 0], sizes = [2, 32], strides = [1, 1]} : vector<2x128xf32> to vector<2x32xf32>
    %218 = vector.extract_strided_slice %215 {offsets = [0, 32], sizes = [2, 32], strides = [1, 1]} : vector<2x128xf32> to vector<2x32xf32>
    %219 = vector.extract_strided_slice %216 {offsets = [0, 64], sizes = [2, 32], strides = [1, 1]} : vector<2x128xf32> to vector<2x32xf32>
    %220 = vector.extract_strided_slice %215 {offsets = [0, 96], sizes = [2, 32], strides = [1, 1]} : vector<2x128xf32> to vector<2x32xf32>
    %221 = arith.mulf %218, %185 : vector<2x32xf32>
    %222 = arith.mulf %217, %219 : vector<2x32xf32>
    %223 = arith.addf %221, %222 : vector<2x32xf32>
    %224 = math.tanh %223 : vector<2x32xf32>
    %225 = arith.mulf %220, %224 : vector<2x32xf32>
    %226 = tpu.concatenate %225, %206 in 1 : vector<2x32xf32>, vector<2x32xf32> -> vector<2x64xf32>
    %227 = arith.truncf %226 : vector<2x64xf32> to vector<2x64xbf16>
    %cst_37 = arith.constant dense<0.000000e+00> : vector<2x128xf32>
    %228 = tpu.matmul %227, %1, %cst_37 {dimension_numbers = #tpu.dot_dimension_numbers<[1], [0], [0], [1], [0, 0, 1, 1], [], []>} : vector<2x64xbf16>, vector<64x128xbf16>, vector<2x128xf32> -> vector<2x128xf32>
    %229 = arith.addf %228, %4 : vector<2x128xf32>
    %230 = arith.negf %229 : vector<2x128xf32>
    %231 = math.exp %230 : vector<2x128xf32>
    %cst_38 = arith.constant 1.000000e+00 : f32
    %232 = vector.broadcast %cst_38 : f32 to vector<2x128xf32>
    %233 = arith.addf %232, %231 : vector<2x128xf32>
    %234 = arith.divf %232, %233 : vector<2x128xf32>
    %235 = math.tanh %229 : vector<2x128xf32>
    %236 = vector.extract_strided_slice %234 {offsets = [0, 0], sizes = [2, 32], strides = [1, 1]} : vector<2x128xf32> to vector<2x32xf32>
    %237 = vector.extract_strided_slice %234 {offsets = [0, 32], sizes = [2, 32], strides = [1, 1]} : vector<2x128xf32> to vector<2x32xf32>
    %238 = vector.extract_strided_slice %235 {offsets = [0, 64], sizes = [2, 32], strides = [1, 1]} : vector<2x128xf32> to vector<2x32xf32>
    %239 = vector.extract_strided_slice %234 {offsets = [0, 96], sizes = [2, 32], strides = [1, 1]} : vector<2x128xf32> to vector<2x32xf32>
    %240 = arith.mulf %237, %204 : vector<2x32xf32>
    %241 = arith.mulf %236, %238 : vector<2x32xf32>
    %242 = arith.addf %240, %241 : vector<2x32xf32>
    %243 = math.tanh %242 : vector<2x32xf32>
    %244 = arith.mulf %239, %243 : vector<2x32xf32>
    %245 = vector.extract_strided_slice %12 {offsets = [12, 0], sizes = [2, 128], strides = [1, 1]} : vector<16x128xf32> to vector<2x128xf32>
    %246 = arith.truncf %225 : vector<2x32xf32> to vector<2x32xbf16>
    %cst_39 = arith.constant dense<0.000000e+00> : vector<2x128xf32>
    %247 = tpu.matmul %246, %0, %cst_39 {dimension_numbers = #tpu.dot_dimension_numbers<[1], [0], [0], [1], [0, 0, 1, 1], [], []>} : vector<2x32xbf16>, vector<32x128xbf16>, vector<2x128xf32> -> vector<2x128xf32>
    %248 = arith.addf %247, %245 : vector<2x128xf32>
    %249 = arith.negf %248 : vector<2x128xf32>
    %250 = math.exp %249 : vector<2x128xf32>
    %cst_40 = arith.constant 1.000000e+00 : f32
    %251 = vector.broadcast %cst_40 : f32 to vector<2x128xf32>
    %252 = arith.addf %251, %250 : vector<2x128xf32>
    %253 = arith.divf %251, %252 : vector<2x128xf32>
    %254 = math.tanh %248 : vector<2x128xf32>
    %255 = vector.extract_strided_slice %253 {offsets = [0, 0], sizes = [2, 32], strides = [1, 1]} : vector<2x128xf32> to vector<2x32xf32>
    %256 = vector.extract_strided_slice %253 {offsets = [0, 32], sizes = [2, 32], strides = [1, 1]} : vector<2x128xf32> to vector<2x32xf32>
    %257 = vector.extract_strided_slice %254 {offsets = [0, 64], sizes = [2, 32], strides = [1, 1]} : vector<2x128xf32> to vector<2x32xf32>
    %258 = vector.extract_strided_slice %253 {offsets = [0, 96], sizes = [2, 32], strides = [1, 1]} : vector<2x128xf32> to vector<2x32xf32>
    %259 = arith.mulf %256, %223 : vector<2x32xf32>
    %260 = arith.mulf %255, %257 : vector<2x32xf32>
    %261 = arith.addf %259, %260 : vector<2x32xf32>
    %262 = math.tanh %261 : vector<2x32xf32>
    %263 = arith.mulf %258, %262 : vector<2x32xf32>
    %264 = tpu.concatenate %263, %244 in 1 : vector<2x32xf32>, vector<2x32xf32> -> vector<2x64xf32>
    %265 = arith.truncf %264 : vector<2x64xf32> to vector<2x64xbf16>
    %cst_41 = arith.constant dense<0.000000e+00> : vector<2x128xf32>
    %266 = tpu.matmul %265, %1, %cst_41 {dimension_numbers = #tpu.dot_dimension_numbers<[1], [0], [0], [1], [0, 0, 1, 1], [], []>} : vector<2x64xbf16>, vector<64x128xbf16>, vector<2x128xf32> -> vector<2x128xf32>
    %267 = arith.addf %266, %4 : vector<2x128xf32>
    %268 = arith.negf %267 : vector<2x128xf32>
    %269 = math.exp %268 : vector<2x128xf32>
    %cst_42 = arith.constant 1.000000e+00 : f32
    %270 = vector.broadcast %cst_42 : f32 to vector<2x128xf32>
    %271 = arith.addf %270, %269 : vector<2x128xf32>
    %272 = arith.divf %270, %271 : vector<2x128xf32>
    %273 = math.tanh %267 : vector<2x128xf32>
    %274 = vector.extract_strided_slice %272 {offsets = [0, 0], sizes = [2, 32], strides = [1, 1]} : vector<2x128xf32> to vector<2x32xf32>
    %275 = vector.extract_strided_slice %272 {offsets = [0, 32], sizes = [2, 32], strides = [1, 1]} : vector<2x128xf32> to vector<2x32xf32>
    %276 = vector.extract_strided_slice %273 {offsets = [0, 64], sizes = [2, 32], strides = [1, 1]} : vector<2x128xf32> to vector<2x32xf32>
    %277 = vector.extract_strided_slice %272 {offsets = [0, 96], sizes = [2, 32], strides = [1, 1]} : vector<2x128xf32> to vector<2x32xf32>
    %278 = arith.mulf %275, %242 : vector<2x32xf32>
    %279 = arith.mulf %274, %276 : vector<2x32xf32>
    %280 = arith.addf %278, %279 : vector<2x32xf32>
    %281 = math.tanh %280 : vector<2x32xf32>
    %282 = arith.mulf %277, %281 : vector<2x32xf32>
    %283 = vector.extract_strided_slice %12 {offsets = [14, 0], sizes = [2, 128], strides = [1, 1]} : vector<16x128xf32> to vector<2x128xf32>
    %284 = arith.truncf %263 : vector<2x32xf32> to vector<2x32xbf16>
    %cst_43 = arith.constant dense<0.000000e+00> : vector<2x128xf32>
    %285 = tpu.matmul %284, %0, %cst_43 {dimension_numbers = #tpu.dot_dimension_numbers<[1], [0], [0], [1], [0, 0, 1, 1], [], []>} : vector<2x32xbf16>, vector<32x128xbf16>, vector<2x128xf32> -> vector<2x128xf32>
    %286 = arith.addf %285, %283 : vector<2x128xf32>
    %287 = arith.negf %286 : vector<2x128xf32>
    %288 = math.exp %287 : vector<2x128xf32>
    %cst_44 = arith.constant 1.000000e+00 : f32
    %289 = vector.broadcast %cst_44 : f32 to vector<2x128xf32>
    %290 = arith.addf %289, %288 : vector<2x128xf32>
    %291 = arith.divf %289, %290 : vector<2x128xf32>
    %292 = math.tanh %286 : vector<2x128xf32>
    %293 = vector.extract_strided_slice %291 {offsets = [0, 0], sizes = [2, 32], strides = [1, 1]} : vector<2x128xf32> to vector<2x32xf32>
    %294 = vector.extract_strided_slice %291 {offsets = [0, 32], sizes = [2, 32], strides = [1, 1]} : vector<2x128xf32> to vector<2x32xf32>
    %295 = vector.extract_strided_slice %292 {offsets = [0, 64], sizes = [2, 32], strides = [1, 1]} : vector<2x128xf32> to vector<2x32xf32>
    %296 = vector.extract_strided_slice %291 {offsets = [0, 96], sizes = [2, 32], strides = [1, 1]} : vector<2x128xf32> to vector<2x32xf32>
    %297 = arith.mulf %294, %261 : vector<2x32xf32>
    %298 = arith.mulf %293, %295 : vector<2x32xf32>
    %299 = arith.addf %297, %298 : vector<2x32xf32>
    %300 = math.tanh %299 : vector<2x32xf32>
    %301 = arith.mulf %296, %300 : vector<2x32xf32>
    %302 = tpu.concatenate %301, %282 in 1 : vector<2x32xf32>, vector<2x32xf32> -> vector<2x64xf32>
    %303 = arith.truncf %302 : vector<2x64xf32> to vector<2x64xbf16>
    %cst_45 = arith.constant dense<0.000000e+00> : vector<2x128xf32>
    %304 = tpu.matmul %303, %1, %cst_45 {dimension_numbers = #tpu.dot_dimension_numbers<[1], [0], [0], [1], [0, 0, 1, 1], [], []>} : vector<2x64xbf16>, vector<64x128xbf16>, vector<2x128xf32> -> vector<2x128xf32>
    %305 = arith.addf %304, %4 : vector<2x128xf32>
    %306 = arith.negf %305 : vector<2x128xf32>
    %307 = math.exp %306 : vector<2x128xf32>
    %cst_46 = arith.constant 1.000000e+00 : f32
    %308 = vector.broadcast %cst_46 : f32 to vector<2x128xf32>
    %309 = arith.addf %308, %307 : vector<2x128xf32>
    %310 = arith.divf %308, %309 : vector<2x128xf32>
    %311 = math.tanh %305 : vector<2x128xf32>
    %312 = vector.extract_strided_slice %310 {offsets = [0, 0], sizes = [2, 32], strides = [1, 1]} : vector<2x128xf32> to vector<2x32xf32>
    %313 = vector.extract_strided_slice %310 {offsets = [0, 32], sizes = [2, 32], strides = [1, 1]} : vector<2x128xf32> to vector<2x32xf32>
    %314 = vector.extract_strided_slice %311 {offsets = [0, 64], sizes = [2, 32], strides = [1, 1]} : vector<2x128xf32> to vector<2x32xf32>
    %315 = vector.extract_strided_slice %310 {offsets = [0, 96], sizes = [2, 32], strides = [1, 1]} : vector<2x128xf32> to vector<2x32xf32>
    %316 = arith.mulf %313, %280 : vector<2x32xf32>
    %317 = arith.mulf %312, %314 : vector<2x32xf32>
    %318 = arith.addf %316, %317 : vector<2x32xf32>
    %319 = math.tanh %318 : vector<2x32xf32>
    %320 = arith.mulf %315, %319 : vector<2x32xf32>
    %c0_47 = arith.constant 0 : index
    %c0_48 = arith.constant 0 : index
    %321 = vector.load %arg7[%c0_47, %c0_48] : memref<32x128xbf16, #tpu.memory_space<vmem>>, vector<32x128xbf16>
    %c0_49 = arith.constant 0 : index
    %c0_50 = arith.constant 0 : index
    %322 = vector.load %arg9[%c0_49, %c0_50] : memref<64x128xbf16, #tpu.memory_space<vmem>>, vector<64x128xbf16>
    %c0_51 = arith.constant 0 : index
    %c0_52 = arith.constant 0 : index
    %323 = vector.load %arg10[%c0_51, %c0_52] : memref<1x128xf32, #tpu.memory_space<vmem>>, vector<1x128xf32>
    %324 = vector.shape_cast %323 : vector<1x128xf32> to vector<1x128xf32>
    %325 = vector.broadcast %324 : vector<1x128xf32> to vector<2x128xf32>
    %c0_53 = arith.constant 0 : index
    %c0_54 = arith.constant 0 : index
    %326 = vector.load %arg11[%c0_53, %c0_54] : memref<64x128xbf16, #tpu.memory_space<vmem>>, vector<64x128xbf16>
    %c0_55 = arith.constant 0 : index
    %c0_56 = arith.constant 0 : index
    %327 = vector.load %arg12[%c0_55, %c0_56] : memref<1x128xf32, #tpu.memory_space<vmem>>, vector<1x128xf32>
    %328 = vector.shape_cast %327 : vector<1x128xf32> to vector<1x128xf32>
    %329 = vector.broadcast %328 : vector<1x128xf32> to vector<2x128xf32>
    %330 = vector.extract_strided_slice %5 {offsets = [14, 0], sizes = [2, 16], strides = [1, 1]} : vector<16x16xf32> to vector<2x16xf32>
    %331 = arith.truncf %330 : vector<2x16xf32> to vector<2x16xbf16>
    %c0_57 = arith.constant 0 : index
    %c0_58 = arith.constant 0 : index
    %332 = vector.load %arg6[%c0_57, %c0_58] : memref<16x128xbf16, #tpu.memory_space<vmem>>, vector<16x128xbf16>
    %cst_59 = arith.constant dense<0.000000e+00> : vector<2x128xf32>
    %333 = tpu.matmul %331, %332, %cst_59 {dimension_numbers = #tpu.dot_dimension_numbers<[1], [0], [0], [1], [0, 0, 1, 1], [], []>} : vector<2x16xbf16>, vector<16x128xbf16>, vector<2x128xf32> -> vector<2x128xf32>
    %c0_60 = arith.constant 0 : index
    %c0_61 = arith.constant 0 : index
    %334 = vector.load %arg8[%c0_60, %c0_61] : memref<1x128xf32, #tpu.memory_space<vmem>>, vector<1x128xf32>
    %335 = vector.shape_cast %334 : vector<1x128xf32> to vector<1x128xf32>
    %336 = vector.broadcast %335 : vector<1x128xf32> to vector<2x128xf32>
    %337 = arith.addf %333, %336 : vector<2x128xf32>
    %338 = arith.truncf %301 : vector<2x32xf32> to vector<2x32xbf16>
    %cst_62 = arith.constant dense<0.000000e+00> : vector<2x128xf32>
    %339 = tpu.matmul %338, %321, %cst_62 {dimension_numbers = #tpu.dot_dimension_numbers<[1], [0], [0], [1], [0, 0, 1, 1], [], []>} : vector<2x32xbf16>, vector<32x128xbf16>, vector<2x128xf32> -> vector<2x128xf32>
    %340 = arith.addf %339, %337 : vector<2x128xf32>
    %341 = arith.negf %340 : vector<2x128xf32>
    %342 = math.exp %341 : vector<2x128xf32>
    %cst_63 = arith.constant 1.000000e+00 : f32
    %343 = vector.broadcast %cst_63 : f32 to vector<2x128xf32>
    %344 = arith.addf %343, %342 : vector<2x128xf32>
    %345 = arith.divf %343, %344 : vector<2x128xf32>
    %346 = math.tanh %340 : vector<2x128xf32>
    %347 = vector.extract_strided_slice %345 {offsets = [0, 0], sizes = [2, 32], strides = [1, 1]} : vector<2x128xf32> to vector<2x32xf32>
    %348 = vector.extract_strided_slice %345 {offsets = [0, 32], sizes = [2, 32], strides = [1, 1]} : vector<2x128xf32> to vector<2x32xf32>
    %349 = vector.extract_strided_slice %346 {offsets = [0, 64], sizes = [2, 32], strides = [1, 1]} : vector<2x128xf32> to vector<2x32xf32>
    %350 = vector.extract_strided_slice %345 {offsets = [0, 96], sizes = [2, 32], strides = [1, 1]} : vector<2x128xf32> to vector<2x32xf32>
    %351 = arith.mulf %348, %299 : vector<2x32xf32>
    %352 = arith.mulf %347, %349 : vector<2x32xf32>
    %353 = arith.addf %351, %352 : vector<2x32xf32>
    %354 = math.tanh %353 : vector<2x32xf32>
    %355 = arith.mulf %350, %354 : vector<2x32xf32>
    %356 = tpu.concatenate %355, %320 in 1 : vector<2x32xf32>, vector<2x32xf32> -> vector<2x64xf32>
    %357 = arith.truncf %356 : vector<2x64xf32> to vector<2x64xbf16>
    %cst_64 = arith.constant dense<0.000000e+00> : vector<2x128xf32>
    %358 = tpu.matmul %357, %326, %cst_64 {dimension_numbers = #tpu.dot_dimension_numbers<[1], [0], [0], [1], [0, 0, 1, 1], [], []>} : vector<2x64xbf16>, vector<64x128xbf16>, vector<2x128xf32> -> vector<2x128xf32>
    %359 = arith.addf %358, %329 : vector<2x128xf32>
    %360 = arith.negf %359 : vector<2x128xf32>
    %361 = math.exp %360 : vector<2x128xf32>
    %cst_65 = arith.constant 1.000000e+00 : f32
    %362 = vector.broadcast %cst_65 : f32 to vector<2x128xf32>
    %363 = arith.addf %362, %361 : vector<2x128xf32>
    %364 = arith.divf %362, %363 : vector<2x128xf32>
    %365 = math.tanh %359 : vector<2x128xf32>
    %366 = vector.extract_strided_slice %364 {offsets = [0, 0], sizes = [2, 32], strides = [1, 1]} : vector<2x128xf32> to vector<2x32xf32>
    %367 = vector.extract_strided_slice %364 {offsets = [0, 32], sizes = [2, 32], strides = [1, 1]} : vector<2x128xf32> to vector<2x32xf32>
    %368 = vector.extract_strided_slice %365 {offsets = [0, 64], sizes = [2, 32], strides = [1, 1]} : vector<2x128xf32> to vector<2x32xf32>
    %369 = vector.extract_strided_slice %364 {offsets = [0, 96], sizes = [2, 32], strides = [1, 1]} : vector<2x128xf32> to vector<2x32xf32>
    %370 = arith.mulf %367, %318 : vector<2x32xf32>
    %371 = arith.mulf %366, %368 : vector<2x32xf32>
    %372 = arith.addf %370, %371 : vector<2x32xf32>
    %373 = math.tanh %372 : vector<2x32xf32>
    %374 = arith.mulf %369, %373 : vector<2x32xf32>
    %375 = tpu.concatenate %374, %355 in 1 : vector<2x32xf32>, vector<2x32xf32> -> vector<2x64xf32>
    %376 = arith.truncf %375 : vector<2x64xf32> to vector<2x64xbf16>
    %cst_66 = arith.constant dense<0.000000e+00> : vector<2x128xf32>
    %377 = tpu.matmul %376, %322, %cst_66 {dimension_numbers = #tpu.dot_dimension_numbers<[1], [0], [0], [1], [0, 0, 1, 1], [], []>} : vector<2x64xbf16>, vector<64x128xbf16>, vector<2x128xf32> -> vector<2x128xf32>
    %378 = arith.addf %377, %325 : vector<2x128xf32>
    %379 = arith.negf %378 : vector<2x128xf32>
    %380 = math.exp %379 : vector<2x128xf32>
    %cst_67 = arith.constant 1.000000e+00 : f32
    %381 = vector.broadcast %cst_67 : f32 to vector<2x128xf32>
    %382 = arith.addf %381, %380 : vector<2x128xf32>
    %383 = arith.divf %381, %382 : vector<2x128xf32>
    %384 = math.tanh %378 : vector<2x128xf32>
    %385 = vector.extract_strided_slice %383 {offsets = [0, 0], sizes = [2, 32], strides = [1, 1]} : vector<2x128xf32> to vector<2x32xf32>
    %386 = vector.extract_strided_slice %383 {offsets = [0, 32], sizes = [2, 32], strides = [1, 1]} : vector<2x128xf32> to vector<2x32xf32>
    %387 = vector.extract_strided_slice %384 {offsets = [0, 64], sizes = [2, 32], strides = [1, 1]} : vector<2x128xf32> to vector<2x32xf32>
    %388 = vector.extract_strided_slice %383 {offsets = [0, 96], sizes = [2, 32], strides = [1, 1]} : vector<2x128xf32> to vector<2x32xf32>
    %389 = arith.mulf %386, %353 : vector<2x32xf32>
    %390 = arith.mulf %385, %387 : vector<2x32xf32>
    %391 = arith.addf %389, %390 : vector<2x32xf32>
    %392 = math.tanh %391 : vector<2x32xf32>
    %393 = arith.mulf %388, %392 : vector<2x32xf32>
    %394 = tpu.concatenate %393, %374 in 1 : vector<2x32xf32>, vector<2x32xf32> -> vector<2x64xf32>
    %395 = arith.truncf %394 : vector<2x64xf32> to vector<2x64xbf16>
    %cst_68 = arith.constant dense<0.000000e+00> : vector<2x128xf32>
    %396 = tpu.matmul %395, %326, %cst_68 {dimension_numbers = #tpu.dot_dimension_numbers<[1], [0], [0], [1], [0, 0, 1, 1], [], []>} : vector<2x64xbf16>, vector<64x128xbf16>, vector<2x128xf32> -> vector<2x128xf32>
    %397 = arith.addf %396, %329 : vector<2x128xf32>
    %398 = arith.negf %397 : vector<2x128xf32>
    %399 = math.exp %398 : vector<2x128xf32>
    %cst_69 = arith.constant 1.000000e+00 : f32
    %400 = vector.broadcast %cst_69 : f32 to vector<2x128xf32>
    %401 = arith.addf %400, %399 : vector<2x128xf32>
    %402 = arith.divf %400, %401 : vector<2x128xf32>
    %403 = math.tanh %397 : vector<2x128xf32>
    %404 = vector.extract_strided_slice %402 {offsets = [0, 0], sizes = [2, 32], strides = [1, 1]} : vector<2x128xf32> to vector<2x32xf32>
    %405 = vector.extract_strided_slice %402 {offsets = [0, 32], sizes = [2, 32], strides = [1, 1]} : vector<2x128xf32> to vector<2x32xf32>
    %406 = vector.extract_strided_slice %403 {offsets = [0, 64], sizes = [2, 32], strides = [1, 1]} : vector<2x128xf32> to vector<2x32xf32>
    %407 = vector.extract_strided_slice %402 {offsets = [0, 96], sizes = [2, 32], strides = [1, 1]} : vector<2x128xf32> to vector<2x32xf32>
    %408 = arith.mulf %405, %372 : vector<2x32xf32>
    %409 = arith.mulf %404, %406 : vector<2x32xf32>
    %410 = arith.addf %408, %409 : vector<2x32xf32>
    %411 = math.tanh %410 : vector<2x32xf32>
    %412 = arith.mulf %407, %411 : vector<2x32xf32>
    %413 = tpu.concatenate %412, %393 in 1 : vector<2x32xf32>, vector<2x32xf32> -> vector<2x64xf32>
    %414 = arith.truncf %413 : vector<2x64xf32> to vector<2x64xbf16>
    %cst_70 = arith.constant dense<0.000000e+00> : vector<2x128xf32>
    %415 = tpu.matmul %414, %322, %cst_70 {dimension_numbers = #tpu.dot_dimension_numbers<[1], [0], [0], [1], [0, 0, 1, 1], [], []>} : vector<2x64xbf16>, vector<64x128xbf16>, vector<2x128xf32> -> vector<2x128xf32>
    %416 = arith.addf %415, %325 : vector<2x128xf32>
    %417 = arith.negf %416 : vector<2x128xf32>
    %418 = math.exp %417 : vector<2x128xf32>
    %cst_71 = arith.constant 1.000000e+00 : f32
    %419 = vector.broadcast %cst_71 : f32 to vector<2x128xf32>
    %420 = arith.addf %419, %418 : vector<2x128xf32>
    %421 = arith.divf %419, %420 : vector<2x128xf32>
    %422 = math.tanh %416 : vector<2x128xf32>
    %423 = vector.extract_strided_slice %421 {offsets = [0, 0], sizes = [2, 32], strides = [1, 1]} : vector<2x128xf32> to vector<2x32xf32>
    %424 = vector.extract_strided_slice %421 {offsets = [0, 32], sizes = [2, 32], strides = [1, 1]} : vector<2x128xf32> to vector<2x32xf32>
    %425 = vector.extract_strided_slice %422 {offsets = [0, 64], sizes = [2, 32], strides = [1, 1]} : vector<2x128xf32> to vector<2x32xf32>
    %426 = vector.extract_strided_slice %421 {offsets = [0, 96], sizes = [2, 32], strides = [1, 1]} : vector<2x128xf32> to vector<2x32xf32>
    %427 = arith.mulf %424, %391 : vector<2x32xf32>
    %428 = arith.mulf %423, %425 : vector<2x32xf32>
    %429 = arith.addf %427, %428 : vector<2x32xf32>
    %430 = math.tanh %429 : vector<2x32xf32>
    %431 = arith.mulf %426, %430 : vector<2x32xf32>
    %432 = tpu.concatenate %431, %412 in 1 : vector<2x32xf32>, vector<2x32xf32> -> vector<2x64xf32>
    %433 = arith.truncf %432 : vector<2x64xf32> to vector<2x64xbf16>
    %cst_72 = arith.constant dense<0.000000e+00> : vector<2x128xf32>
    %434 = tpu.matmul %433, %326, %cst_72 {dimension_numbers = #tpu.dot_dimension_numbers<[1], [0], [0], [1], [0, 0, 1, 1], [], []>} : vector<2x64xbf16>, vector<64x128xbf16>, vector<2x128xf32> -> vector<2x128xf32>
    %435 = arith.addf %434, %329 : vector<2x128xf32>
    %436 = arith.negf %435 : vector<2x128xf32>
    %437 = math.exp %436 : vector<2x128xf32>
    %cst_73 = arith.constant 1.000000e+00 : f32
    %438 = vector.broadcast %cst_73 : f32 to vector<2x128xf32>
    %439 = arith.addf %438, %437 : vector<2x128xf32>
    %440 = arith.divf %438, %439 : vector<2x128xf32>
    %441 = math.tanh %435 : vector<2x128xf32>
    %442 = vector.extract_strided_slice %440 {offsets = [0, 0], sizes = [2, 32], strides = [1, 1]} : vector<2x128xf32> to vector<2x32xf32>
    %443 = vector.extract_strided_slice %440 {offsets = [0, 32], sizes = [2, 32], strides = [1, 1]} : vector<2x128xf32> to vector<2x32xf32>
    %444 = vector.extract_strided_slice %441 {offsets = [0, 64], sizes = [2, 32], strides = [1, 1]} : vector<2x128xf32> to vector<2x32xf32>
    %445 = vector.extract_strided_slice %440 {offsets = [0, 96], sizes = [2, 32], strides = [1, 1]} : vector<2x128xf32> to vector<2x32xf32>
    %446 = arith.mulf %443, %410 : vector<2x32xf32>
    %447 = arith.mulf %442, %444 : vector<2x32xf32>
    %448 = arith.addf %446, %447 : vector<2x32xf32>
    %449 = math.tanh %448 : vector<2x32xf32>
    %450 = arith.mulf %445, %449 : vector<2x32xf32>
    %451 = tpu.concatenate %450, %431 in 1 : vector<2x32xf32>, vector<2x32xf32> -> vector<2x64xf32>
    %452 = arith.truncf %451 : vector<2x64xf32> to vector<2x64xbf16>
    %cst_74 = arith.constant dense<0.000000e+00> : vector<2x128xf32>
    %453 = tpu.matmul %452, %322, %cst_74 {dimension_numbers = #tpu.dot_dimension_numbers<[1], [0], [0], [1], [0, 0, 1, 1], [], []>} : vector<2x64xbf16>, vector<64x128xbf16>, vector<2x128xf32> -> vector<2x128xf32>
    %454 = arith.addf %453, %325 : vector<2x128xf32>
    %455 = arith.negf %454 : vector<2x128xf32>
    %456 = math.exp %455 : vector<2x128xf32>
    %cst_75 = arith.constant 1.000000e+00 : f32
    %457 = vector.broadcast %cst_75 : f32 to vector<2x128xf32>
    %458 = arith.addf %457, %456 : vector<2x128xf32>
    %459 = arith.divf %457, %458 : vector<2x128xf32>
    %460 = math.tanh %454 : vector<2x128xf32>
    %461 = vector.extract_strided_slice %459 {offsets = [0, 0], sizes = [2, 32], strides = [1, 1]} : vector<2x128xf32> to vector<2x32xf32>
    %462 = vector.extract_strided_slice %459 {offsets = [0, 32], sizes = [2, 32], strides = [1, 1]} : vector<2x128xf32> to vector<2x32xf32>
    %463 = vector.extract_strided_slice %460 {offsets = [0, 64], sizes = [2, 32], strides = [1, 1]} : vector<2x128xf32> to vector<2x32xf32>
    %464 = vector.extract_strided_slice %459 {offsets = [0, 96], sizes = [2, 32], strides = [1, 1]} : vector<2x128xf32> to vector<2x32xf32>
    %465 = arith.mulf %462, %429 : vector<2x32xf32>
    %466 = arith.mulf %461, %463 : vector<2x32xf32>
    %467 = arith.addf %465, %466 : vector<2x32xf32>
    %468 = math.tanh %467 : vector<2x32xf32>
    %469 = arith.mulf %464, %468 : vector<2x32xf32>
    %470 = tpu.concatenate %469, %450 in 1 : vector<2x32xf32>, vector<2x32xf32> -> vector<2x64xf32>
    %471 = arith.truncf %470 : vector<2x64xf32> to vector<2x64xbf16>
    %cst_76 = arith.constant dense<0.000000e+00> : vector<2x128xf32>
    %472 = tpu.matmul %471, %326, %cst_76 {dimension_numbers = #tpu.dot_dimension_numbers<[1], [0], [0], [1], [0, 0, 1, 1], [], []>} : vector<2x64xbf16>, vector<64x128xbf16>, vector<2x128xf32> -> vector<2x128xf32>
    %473 = arith.addf %472, %329 : vector<2x128xf32>
    %474 = arith.negf %473 : vector<2x128xf32>
    %475 = math.exp %474 : vector<2x128xf32>
    %cst_77 = arith.constant 1.000000e+00 : f32
    %476 = vector.broadcast %cst_77 : f32 to vector<2x128xf32>
    %477 = arith.addf %476, %475 : vector<2x128xf32>
    %478 = arith.divf %476, %477 : vector<2x128xf32>
    %479 = math.tanh %473 : vector<2x128xf32>
    %480 = vector.extract_strided_slice %478 {offsets = [0, 0], sizes = [2, 32], strides = [1, 1]} : vector<2x128xf32> to vector<2x32xf32>
    %481 = vector.extract_strided_slice %478 {offsets = [0, 32], sizes = [2, 32], strides = [1, 1]} : vector<2x128xf32> to vector<2x32xf32>
    %482 = vector.extract_strided_slice %479 {offsets = [0, 64], sizes = [2, 32], strides = [1, 1]} : vector<2x128xf32> to vector<2x32xf32>
    %483 = vector.extract_strided_slice %478 {offsets = [0, 96], sizes = [2, 32], strides = [1, 1]} : vector<2x128xf32> to vector<2x32xf32>
    %484 = arith.mulf %481, %448 : vector<2x32xf32>
    %485 = arith.mulf %480, %482 : vector<2x32xf32>
    %486 = arith.addf %484, %485 : vector<2x32xf32>
    %487 = math.tanh %486 : vector<2x32xf32>
    %488 = arith.mulf %483, %487 : vector<2x32xf32>
    %489 = tpu.concatenate %374, %412, %450, %488 in 0 : vector<2x32xf32>, vector<2x32xf32>, vector<2x32xf32>, vector<2x32xf32> -> vector<8x32xf32>
    %490 = arith.truncf %489 : vector<8x32xf32> to vector<8x32xbf16>
    %c0_78 = arith.constant 0 : index
    %c0_79 = arith.constant 0 : index
    %491 = vector.load %arg13[%c0_78, %c0_79] : memref<32x4xbf16, #tpu.memory_space<vmem>>, vector<32x4xbf16>
    %cst_80 = arith.constant dense<0.000000e+00> : vector<8x4xf32>
    %492 = tpu.matmul %490, %491, %cst_80 {dimension_numbers = #tpu.dot_dimension_numbers<[1], [0], [0], [1], [0, 0, 1, 1], [], []>} : vector<8x32xbf16>, vector<32x4xbf16>, vector<8x4xf32> -> vector<8x4xf32>
    %c0_81 = arith.constant 0 : index
    %c0_82 = arith.constant 0 : index
    %493 = vector.load %arg14[%c0_81, %c0_82] : memref<1x4xf32, #tpu.memory_space<vmem>>, vector<1x4xf32>
    %494 = vector.shape_cast %493 : vector<1x4xf32> to vector<1x4xf32>
    %495 = vector.broadcast %494 : vector<1x4xf32> to vector<8x4xf32>
    %496 = arith.addf %492, %495 : vector<8x4xf32>
    %c0_83 = arith.constant 0 : index
    %c0_84 = arith.constant 0 : index
    %497 = vector.load %arg15[%c0_83, %c0_84] : memref<8x4xf32, #tpu.memory_space<vmem>>, vector<8x4xf32>
    tpu.vector_store %arg15[%c0_83, %c0_84], %496 {strides = array<i32>} : memref<8x4xf32, #tpu.memory_space<vmem>>, vector<8x4xf32>,
    return
  }
}

</mosaic_0001>

<llo_original>
// kernel: tpu_custom_call.1
$region0: #{tpu_custom_call.1}
  #allocation0 [shape = 'u32[]', space=smem, size = 0x4, offset = 0x4, fixed_abs, tag = 'smem constant byte address 0x4 - core index']
  #allocation1 [shape = 'u32[144,128]{1,0:T(1,128)}', space=vmem, size = 0x12000, scoped, tag = 'internal scratch']
  %s0 = inlined_call_operand.hbm [shape: f32[16,16], index: 0, kind: input, shape index: {}]
  %s1 = inlined_call_operand.hbm [shape: bf16[16,128], index: 1, kind: input, shape index: {}]
  %s2 = inlined_call_operand.hbm [shape: bf16[32,128], index: 2, kind: input, shape index: {}]
  %s3 = inlined_call_operand.hbm [shape: f32[1,128], index: 3, kind: input, shape index: {}]
  %s4 = inlined_call_operand.vmem [shape: bf16[64,128], index: 4, kind: input, shape index: {}]
  %s5 = inlined_call_operand.hbm [shape: f32[1,128], index: 5, kind: input, shape index: {}]
  %s6 = inlined_call_operand.vmem [shape: bf16[16,128], index: 6, kind: input, shape index: {}]
  %s7 = inlined_call_operand.hbm [shape: bf16[32,128], index: 7, kind: input, shape index: {}]
  %s8 = inlined_call_operand.vmem [shape: f32[1,128], index: 8, kind: input, shape index: {}]
  %s9 = inlined_call_operand.hbm [shape: bf16[64,128], index: 9, kind: input, shape index: {}]
  %s10 = inlined_call_operand.vmem [shape: f32[1,128], index: 10, kind: input, shape index: {}]
  %s11 = inlined_call_operand.hbm [shape: bf16[64,128], index: 11, kind: input, shape index: {}]
  %s12 = inlined_call_operand.vmem [shape: f32[1,128], index: 12, kind: input, shape index: {}]
  %s13 = inlined_call_operand.vmem [shape: bf16[32,4], index: 13, kind: input, shape index: {}]
  %s14 = inlined_call_operand.vmem [shape: f32[1,4], index: 14, kind: input, shape index: {}]
  %s15 = inlined_call_operand.vmem [shape: f32[8,4], index: 15, kind: output, shape index: {}]
  %s16 = sld [smem:[#allocation0]]
  $region102: #{tpu_custom_call.1} parent=0
    _
  %s18 = ssub.s32 1, %s16
  %s19 = scalar_select 0, %s18, %s16
  $region1: #{tpu_custom_call.1} parent=0
    #allocation2 [shape = 'u8[8192]{0}', space=vmem, size = 0x2000, scoped, tag = 'input window, operand 0, single buffered']
    #allocation3 [shape = 's32[1]{0}', space=sflag, size = 0x4, scoped, tag = 'scoped memory for tpu_custom_call.1']
    #allocation4 [shape = 'u8[4096]{0}', space=vmem, size = 0x1000, scoped, tag = 'input window, operand 1, single buffered']
    #allocation5 [shape = 's32[1]{0}', space=sflag, size = 0x4, scoped, tag = 'scoped memory for tpu_custom_call.1']
    #allocation6 [shape = 'u8[8192]{0}', space=vmem, size = 0x2000, scoped, tag = 'input window, operand 2, single buffered']
    #allocation7 [shape = 'u8[512]{0}', space=vmem, size = 0x400, scoped, tag = 'input window, operand 3, single buffered']
    #allocation8 [shape = 's32[1]{0}', space=sflag, size = 0x4, scoped, tag = 'scoped memory for tpu_custom_call.1']
    #allocation9 [shape = 'u8[512]{0}', space=vmem, size = 0x400, scoped, tag = 'input window, operand 5, single buffered']
    #allocation10 [shape = 'u8[8192]{0}', space=vmem, size = 0x2000, scoped, tag = 'input window, operand 7, single buffered']
    #allocation11 [shape = 's32[1]{0}', space=sflag, size = 0x4, scoped, tag = 'scoped memory for tpu_custom_call.1']
    #allocation12 [shape = 'u8[16384]{0}', space=vmem, size = 0x4000, scoped, tag = 'input window, operand 9, single buffered']
    #allocation13 [shape = 'u8[16384]{0}', space=vmem, size = 0x4000, scoped, tag = 'input window, operand 11, single buffered']
    #allocation14 [shape = 's32[1]{0}', space=sflag, size = 0x4, scoped, tag = 'scoped memory for tpu_custom_call.1']
    %20 = vsyncpa [#allocation3], 0
    %21 = vsyncpa [#allocation5], 0
    %22 = vsyncpa [#allocation8], 0
    %23 = vsyncpa [#allocation11], 0
    %24 = vsyncpa [#allocation14], 0
    // Predicated region
    $region2: #{tpu_custom_call.1} parent=1 // pred_check
      _
    $region3: #{tpu_custom_call.1} parent=1 // pred_check_branch
      %26 = sbr.rel (0) target = $region5
    $region4: #{tpu_custom_call.1} parent=1 // pred_region
      %s28 = ssub.s32 256, 256
      %29 = vsyncadd [#allocation3], %s28
      %s30 = sshll.u32 [#allocation2], 4
      %s31 = int_to_ptr.vmem [resolvable:$true] %s30
      %36 = dma.hbm_to_vmem [thread:$0]  %s0, 256, %s31, [#allocation3], 128, 128, 8
    $region5: #{tpu_custom_call.1} parent=1 // pred_fallthru
      _
    // Predicated region
    $region6: #{tpu_custom_call.1} parent=1 // pred_check
      _
    $region7: #{tpu_custom_call.1} parent=1 // pred_check_branch
      %38 = sbr.rel (0) target = $region9
    $region8: #{tpu_custom_call.1} parent=1 // pred_region
      %s40 = ssub.s32 128, 128
      %41 = vsyncadd [#allocation5], %s40
      %s42 = sshll.u32 [#allocation4], 4
      %s43 = int_to_ptr.vmem [resolvable:$true] %s42
      %48 = dma.hbm_to_vmem [thread:$0]  %s1, 128, %s43, [#allocation5], 64, 64, 4
    $region9: #{tpu_custom_call.1} parent=1 // pred_fallthru
      _
    // Predicated region
    $region10: #{tpu_custom_call.1} parent=1 // pred_check
      _
    $region11: #{tpu_custom_call.1} parent=1 // pred_check_branch
      %50 = sbr.rel (0) target = $region13
    $region12: #{tpu_custom_call.1} parent=1 // pred_region
      %s52 = ssub.s32 256, 256
      %53 = vsyncadd [#allocation5], %s52
      %s54 = sshll.u32 [#allocation6], 4
      %s55 = int_to_ptr.vmem [resolvable:$true] %s54
      %60 = dma.hbm_to_vmem [thread:$0]  %s2, 256, %s55, [#allocation5], 64, 64, 4
    $region13: #{tpu_custom_call.1} parent=1 // pred_fallthru
      _
    // Predicated region
    $region14: #{tpu_custom_call.1} parent=1 // pred_check
      _
    $region15: #{tpu_custom_call.1} parent=1 // pred_check_branch
      %62 = sbr.rel (0) target = $region17
    $region16: #{tpu_custom_call.1} parent=1 // pred_region
      %s64 = ssub.s32 16, 16
      %65 = vsyncadd [#allocation8], %s64
      %s67 = sshll.u32 [#allocation7], 4
      %s68 = int_to_ptr.vmem [resolvable:$true] %s67
      %70 = dma.hbm_to_vmem [thread:$0]  %s3, 16, %s68, [#allocation8]
    $region17: #{tpu_custom_call.1} parent=1 // pred_fallthru
      _
    // Predicated region
    $region18: #{tpu_custom_call.1} parent=1 // pred_check
      _
    $region19: #{tpu_custom_call.1} parent=1 // pred_check_branch
      %72 = sbr.rel (0) target = $region21
    $region20: #{tpu_custom_call.1} parent=1 // pred_region
      _
    $region21: #{tpu_custom_call.1} parent=1 // pred_fallthru
      _
    // Predicated region
    $region22: #{tpu_custom_call.1} parent=1 // pred_check
      _
    $region23: #{tpu_custom_call.1} parent=1 // pred_check_branch
      %74 = sbr.rel (0) target = $region25
    $region24: #{tpu_custom_call.1} parent=1 // pred_region
      %s76 = ssub.s32 16, 16
      %77 = vsyncadd [#allocation8], %s76
      %s79 = sshll.u32 [#allocation9], 4
      %s80 = int_to_ptr.vmem [resolvable:$true] %s79
      %82 = dma.hbm_to_vmem [thread:$0]  %s5, 16, %s80, [#allocation8]
    $region25: #{tpu_custom_call.1} parent=1 // pred_fallthru
      _
    // Predicated region
    $region26: #{tpu_custom_call.1} parent=1 // pred_check
      _
    $region27: #{tpu_custom_call.1} parent=1 // pred_check_branch
      %84 = sbr.rel (0) target = $region29
    $region28: #{tpu_custom_call.1} parent=1 // pred_region
      _
    $region29: #{tpu_custom_call.1} parent=1 // pred_fallthru
      _
    // Predicated region
    $region30: #{tpu_custom_call.1} parent=1 // pred_check
      _
    $region31: #{tpu_custom_call.1} parent=1 // pred_check_branch
      %86 = sbr.rel (0) target = $region33
    $region32: #{tpu_custom_call.1} parent=1 // pred_region
      %s88 = ssub.s32 256, 256
      %89 = vsyncadd [#allocation11], %s88
      %s90 = sshll.u32 [#allocation10], 4
      %s91 = int_to_ptr.vmem [resolvable:$true] %s90
      %96 = dma.hbm_to_vmem [thread:$0]  %s7, 256, %s91, [#allocation11], 64, 64, 4
    $region33: #{tpu_custom_call.1} parent=1 // pred_fallthru
      _
    // Predicated region
    $region34: #{tpu_custom_call.1} parent=1 // pred_check
      _
    $region35: #{tpu_custom_call.1} parent=1 // pred_check_branch
      %98 = sbr.rel (0) target = $region37
    $region36: #{tpu_custom_call.1} parent=1 // pred_region
      _
    $region37: #{tpu_custom_call.1} parent=1 // pred_fallthru
      _
    // Predicated region
    $region38: #{tpu_custom_call.1} parent=1 // pred_check
      _
    $region39: #{tpu_custom_call.1} parent=1 // pred_check_branch
      %100 = sbr.rel (0) target = $region41
    $region40: #{tpu_custom_call.1} parent=1 // pred_region
      %s102 = ssub.s32 512, 512
      %103 = vsyncadd [#allocation11], %s102
      %s104 = sshll.u32 [#allocation12], 4
      %s105 = int_to_ptr.vmem [resolvable:$true] %s104
      %110 = dma.hbm_to_vmem [thread:$0]  %s9, 512, %s105, [#allocation11], 64, 64, 4
    $region41: #{tpu_custom_call.1} parent=1 // pred_fallthru
      _
    // Predicated region
    $region42: #{tpu_custom_call.1} parent=1 // pred_check
      _
    $region43: #{tpu_custom_call.1} parent=1 // pred_check_branch
      %112 = sbr.rel (0) target = $region45
    $region44: #{tpu_custom_call.1} parent=1 // pred_region
      _
    $region45: #{tpu_custom_call.1} parent=1 // pred_fallthru
      _
    // Predicated region
    $region46: #{tpu_custom_call.1} parent=1 // pred_check
      _
    $region47: #{tpu_custom_call.1} parent=1 // pred_check_branch
      %114 = sbr.rel (0) target = $region49
    $region48: #{tpu_custom_call.1} parent=1 // pred_region
      %s116 = ssub.s32 512, 512
      %117 = vsyncadd [#allocation14], %s116
      %s118 = sshll.u32 [#allocation13], 4
      %s119 = int_to_ptr.vmem [resolvable:$true] %s118
      %124 = dma.hbm_to_vmem [thread:$0]  %s11, 512, %s119, [#allocation14], 64, 64, 4
    $region49: #{tpu_custom_call.1} parent=1 // pred_fallthru
      _
    // Predicated region
    $region50: #{tpu_custom_call.1} parent=1 // pred_check
      _
    $region51: #{tpu_custom_call.1} parent=1 // pred_check_branch
      %126 = sbr.rel (0) target = $region53
    $region52: #{tpu_custom_call.1} parent=1 // pred_region
      _
    $region53: #{tpu_custom_call.1} parent=1 // pred_fallthru
      _
    // Predicated region
    $region54: #{tpu_custom_call.1} parent=1 // pred_check
      _
    $region55: #{tpu_custom_call.1} parent=1 // pred_check_branch
      %128 = sbr.rel (0) target = $region57
    $region56: #{tpu_custom_call.1} parent=1 // pred_region
      _
    $region57: #{tpu_custom_call.1} parent=1 // pred_fallthru
      _
    // Predicated region
    $region58: #{tpu_custom_call.1} parent=1 // pred_check
      _
    $region59: #{tpu_custom_call.1} parent=1 // pred_check_branch
      %130 = sbr.rel (0) target = $region61
    $region60: #{tpu_custom_call.1} parent=1 // pred_region
      _
    $region61: #{tpu_custom_call.1} parent=1 // pred_fallthru
      _
    // Predicated region
    $region62: #{tpu_custom_call.1} parent=1 // pred_check
      _
    $region63: #{tpu_custom_call.1} parent=1 // pred_check_branch
      %132 = sbr.rel (0) target = $region65
    $region64: #{tpu_custom_call.1} parent=1 // pred_region
      %133 = dma.done [#allocation3], 256
    $region65: #{tpu_custom_call.1} parent=1 // pred_fallthru
      _
    // Predicated region
    $region66: #{tpu_custom_call.1} parent=1 // pred_check
      _
    $region67: #{tpu_custom_call.1} parent=1 // pred_check_branch
      %135 = sbr.rel (0) target = $region69
    $region68: #{tpu_custom_call.1} parent=1 // pred_region
      %136 = dma.done [#allocation5], 128
    $region69: #{tpu_custom_call.1} parent=1 // pred_fallthru
      _
    // Predicated region
    $region70: #{tpu_custom_call.1} parent=1 // pred_check
      _
    $region71: #{tpu_custom_call.1} parent=1 // pred_check_branch
      %138 = sbr.rel (0) target = $region73
    $region72: #{tpu_custom_call.1} parent=1 // pred_region
      %139 = dma.done [#allocation5], 256
    $region73: #{tpu_custom_call.1} parent=1 // pred_fallthru
      _
    // Predicated region
    $region74: #{tpu_custom_call.1} parent=1 // pred_check
      _
    $region75: #{tpu_custom_call.1} parent=1 // pred_check_branch
      %141 = sbr.rel (0) target = $region77
    $region76: #{tpu_custom_call.1} parent=1 // pred_region
      %142 = dma.done [#allocation8], 16
    $region77: #{tpu_custom_call.1} parent=1 // pred_fallthru
      _
    // Predicated region
    $region78: #{tpu_custom_call.1} parent=1 // pred_check
      _
    $region79: #{tpu_custom_call.1} parent=1 // pred_check_branch
      %144 = sbr.rel (0) target = $region81
    $region80: #{tpu_custom_call.1} parent=1 // pred_region
      %145 = dma.done [#allocation8], 16
    $region81: #{tpu_custom_call.1} parent=1 // pred_fallthru
      _
    // Predicated region
    $region82: #{tpu_custom_call.1} parent=1 // pred_check
      _
    $region83: #{tpu_custom_call.1} parent=1 // pred_check_branch
      %147 = sbr.rel (0) target = $region85
    $region84: #{tpu_custom_call.1} parent=1 // pred_region
      %148 = dma.done [#allocation11], 256
    $region85: #{tpu_custom_call.1} parent=1 // pred_fallthru
      _
    // Predicated region
    $region86: #{tpu_custom_call.1} parent=1 // pred_check
      _
    $region87: #{tpu_custom_call.1} parent=1 // pred_check_branch
      %150 = sbr.rel (0) target = $region89
    $region88: #{tpu_custom_call.1} parent=1 // pred_region
      %151 = dma.done [#allocation11], 512
    $region89: #{tpu_custom_call.1} parent=1 // pred_fallthru
      _
    // Predicated region
    $region90: #{tpu_custom_call.1} parent=1 // pred_check
      _
    $region91: #{tpu_custom_call.1} parent=1 // pred_check_branch
      %153 = sbr.rel (0) target = $region93
    $region92: #{tpu_custom_call.1} parent=1 // pred_region
      %154 = dma.done [#allocation14], 512
    $region93: #{tpu_custom_call.1} parent=1 // pred_fallthru
      _
    %v156 = vld [vmem:[#allocation6] sm:$0xf]
    %v157 = vld [vmem:[#allocation6 + $0x4] sm:$0xf]
    %v158 = vld [vmem:[#allocation6 + $0x8] sm:$0xf]
    %v159 = vld [vmem:[#allocation6 + $0xc] sm:$0xf]
    %v160 = vld [vmem:[%s4] sm:$0xf]
    %v161 = vld [vmem:[%s4 + $0x4] sm:$0xf]
    %v162 = vld [vmem:[%s4 + $0x8] sm:$0xf]
    %v163 = vld [vmem:[%s4 + $0xc] sm:$0xf]
    %v164 = vld [vmem:[%s4 + $0x10] sm:$0xf]
    %v165 = vld [vmem:[%s4 + $0x14] sm:$0xf]
    %v166 = vld [vmem:[%s4 + $0x18] sm:$0xf]
    %v167 = vld [vmem:[%s4 + $0x1c] sm:$0xf]
    %v168 = vld [vmem:[#allocation9] sm:$0x1]
    %v170 = vlaneseq
    %v171 = vshrl.u32 %v170, 7
    %v172 = vsub.s32 0, %v171
    %v173 = vrot.slane %v168, %v172
    %v175 = vld [vmem:[#allocation2] sm:$0xff]
    %v176 = vld [vmem:[#allocation2 + $0x8] sm:$0xff]
    %v177 = vpack.c.bf16 %v176, %v175
    %v178 = vld [vmem:[#allocation4] sm:$0xf]
    %v179 = vld [vmem:[#allocation4 + $0x4] sm:$0xf]
    %v180 = vld [vmem:[#allocation7] sm:$0x1]
    %v182 = vlaneseq
    %v183 = vshrl.u32 %v182, 7
    %v184 = vsub.s32 0, %v183
    %v185 = vrot.slane %v180, %v184
    %v189 = vunpack.c.l.b16 %v178
    %v190 = vunpack.c.l.b16 %v179
    %v191 = vpack.c.b16 %v190, %v189
    %vm193 = vcmask 130048
    %v195 = vsel %vm193, %v177, 0
    %197 = vmatprep.subr.bf16.mxu0 0
    %198 = vmatpush1.bf16.msra.mxu0 %v191
    %199 = vmatprep.subr.bf16.mxu0 0
    %200 = vmatpush1.bf16.msra.mxu0 0
    %201 = vmatprep.subr.bf16.mxu0 0
    %202 = vmatpush1.bf16.msra.mxu0 0
    %203 = vmatprep.subr.bf16.mxu0 0
    %204 = vmatpush1.bf16.msra.mxu0 0
    %205 = vmatprep.subr.bf16.mxu0 0
    %206 = vmatpush1.bf16.msra.mxu0 0
    %207 = vmatprep.subr.bf16.mxu0 0
    %208 = vmatpush1.bf16.msra.mxu0 0
    %209 = vmatprep.subr.bf16.mxu0 0
    %210 = vmatpush1.bf16.msra.mxu0 0
    %211 = vmatprep.subr.bf16.mxu0 0
    %212 = vmatpush1.bf16.msra.mxu0 0
    %213 = vmatprep.subr.bf16.mxu0 0
    %214 = vmatpush1.bf16.msra.mxu0 0
    %215 = vmatprep.subr.bf16.mxu0 0
    %216 = vmatpush1.bf16.msra.mxu0 0
    %217 = vmatprep.subr.bf16.mxu0 0
    %218 = vmatpush1.bf16.msra.mxu0 0
    %219 = vmatprep.subr.bf16.mxu0 0
    %220 = vmatpush1.bf16.msra.mxu0 0
    %221 = vmatprep.subr.bf16.mxu0 0
    %222 = vmatpush1.bf16.msra.mxu0 0
    %223 = vmatprep.subr.bf16.mxu0 0
    %224 = vmatpush1.bf16.msra.mxu0 0
    %225 = vmatprep.subr.bf16.mxu0 0
    %226 = vmatpush1.bf16.msra.mxu0 0
    %227 = vmatprep.subr.bf16.mxu0 0
    %228 = vmatpush1.bf16.msra.mxu0 0
    %229 = vmatprep.mubr.bf16.mxu0 0
    %230 = vmatmul.mubr.bf16.gmra.mrb[0].mxu0 %v195
    %v231 = vpop.f32.mrb[0].mxu0
    %v232 = vadd.f32 %v185, %v231
    %v233 = vpop.f32.mrb[0].mxu0
    %v234 = vpop.f32.mrb[0].mxu0
    %v235 = vadd.f32 %v185, %v234
    %v236 = vpop.f32.mrb[0].mxu0
    %237 = vdwg.mxu0
    %v242 = vunpack.c.l.b16 %v156
    %v243 = vunpack.c.l.b16 %v157
    %v244 = vunpack.c.l.b16 %v158
    %v245 = vunpack.c.l.b16 %v159
    %v246 = vpack.c.b16 %v243, %v242
    %v247 = vpack.c.b16 %v245, %v244
    %vm250 = vcmask 261120
    %v252 = vsel %vm250, 0, 0
    %254 = vmatprep.subr.bf16.mxu0 0
    %255 = vmatpush1.bf16.msra.mxu0 %v246
    %256 = vmatprep.subr.bf16.mxu0 0
    %257 = vmatpush1.bf16.msra.mxu0 %v247
    %258 = vmatprep.subr.bf16.mxu0 0
    %259 = vmatpush1.bf16.msra.mxu0 0
    %260 = vmatprep.subr.bf16.mxu0 0
    %261 = vmatpush1.bf16.msra.mxu0 0
    %262 = vmatprep.subr.bf16.mxu0 0
    %263 = vmatpush1.bf16.msra.mxu0 0
    %264 = vmatprep.subr.bf16.mxu0 0
    %265 = vmatpush1.bf16.msra.mxu0 0
    %266 = vmatprep.subr.bf16.mxu0 0
    %267 = vmatpush1.bf16.msra.mxu0 0
    %268 = vmatprep.subr.bf16.mxu0 0
    %269 = vmatpush1.bf16.msra.mxu0 0
    %270 = vmatprep.subr.bf16.mxu0 0
    %271 = vmatpush1.bf16.msra.mxu0 0
    %272 = vmatprep.subr.bf16.mxu0 0
    %273 = vmatpush1.bf16.msra.mxu0 0
    %274 = vmatprep.subr.bf16.mxu0 0
    %275 = vmatpush1.bf16.msra.mxu0 0
    %276 = vmatprep.subr.bf16.mxu0 0
    %277 = vmatpush1.bf16.msra.mxu0 0
    %278 = vmatprep.subr.bf16.mxu0 0
    %279 = vmatpush1.bf16.msra.mxu0 0
    %280 = vmatprep.subr.bf16.mxu0 0
    %281 = vmatpush1.bf16.msra.mxu0 0
    %282 = vmatprep.subr.bf16.mxu0 0
    %283 = vmatpush1.bf16.msra.mxu0 0
    %284 = vmatprep.subr.bf16.mxu0 0
    %285 = vmatpush1.bf16.msra.mxu0 0
    %286 = vmatprep.mubr.bf16.mxu0 0
    %287 = vmatmul.mubr.bf16.gmra.mrb[0].mxu0 %v252
    %v288 = vpop.f32.mrb[0].mxu0
    %v289 = vadd.f32 %v232, %v288
    %v290 = vpop.f32.mrb[0].mxu0
    %v291 = vpop.f32.mrb[0].mxu0
    %v292 = vpop.f32.mrb[0].mxu0
    %293 = vdwg.mxu0
    %v294 = vxor.u32 %v289, 2147483648
    %v295 = vmul.f32 %v294, 1.442695
    %v296 = vpow.pop %v295
    %v297 = vadd.f32 %v296, 1.0
    %v298 = vrcp.pop %v297
    %v299 = vmul.f32 1.0, %v298
    %v300 = vtanh.pop %v289
    %v301 = vmul.f32 %v299, 0.0
    %303 = vrot.lane.b32.xlu0 %v300, 64
    %v304 = vpop.permute.xlu0 %303
    %v306 = vmul.f32 %v299, %v304
    %308 = vrot.lane.b32.xlu0 %v306, 32
    %v309 = vpop.permute.xlu0 %308
    %v311 = vadd.f32 %v301, %v309
    %v312 = vtanh.pop %v311
    %314 = vrot.lane.b32.xlu0 %v312, 64
    %v315 = vpop.permute.xlu0 %314
    %v317 = vmul.f32 %v299, %v315
    %319 = vrot.lane.b32.xlu0 %v317, 32
    %v320 = vpop.permute.xlu0 %319
    %v322 = vsel %vm250, %v320, 0.0
    %v323 = vpack.c.bf16 %v322, %v322
    %v332 = vunpack.c.l.b16 %v160
    %v333 = vunpack.c.l.b16 %v161
    %v334 = vunpack.c.l.b16 %v162
    %v335 = vunpack.c.l.b16 %v163
    %v336 = vunpack.c.l.b16 %v164
    %v337 = vunpack.c.l.b16 %v165
    %v338 = vunpack.c.l.b16 %v166
    %v339 = vunpack.c.l.b16 %v167
    %v340 = vpack.c.b16 %v333, %v332
    %v341 = vpack.c.b16 %v335, %v334
    %v342 = vpack.c.b16 %v337, %v336
    %v343 = vpack.c.b16 %v339, %v338
    %vm348 = vcmask 523264
    %v350 = vsel %vm348, %v323, 0
    %352 = vmatprep.subr.bf16.mxu0 0
    %353 = vmatpush1.bf16.msra.mxu0 %v340
    %354 = vmatprep.subr.bf16.mxu0 0
    %355 = vmatpush1.bf16.msra.mxu0 %v341
    %356 = vmatprep.subr.bf16.mxu0 0
    %357 = vmatpush1.bf16.msra.mxu0 %v342
    %358 = vmatprep.subr.bf16.mxu0 0
    %359 = vmatpush1.bf16.msra.mxu0 %v343
    %360 = vmatprep.subr.bf16.mxu0 0
    %361 = vmatpush1.bf16.msra.mxu0 0
    %362 = vmatprep.subr.bf16.mxu0 0
    %363 = vmatpush1.bf16.msra.mxu0 0
    %364 = vmatprep.subr.bf16.mxu0 0
    %365 = vmatpush1.bf16.msra.mxu0 0
    %366 = vmatprep.subr.bf16.mxu0 0
    %367 = vmatpush1.bf16.msra.mxu0 0
    %368 = vmatprep.subr.bf16.mxu0 0
    %369 = vmatpush1.bf16.msra.mxu0 0
    %370 = vmatprep.subr.bf16.mxu0 0
    %371 = vmatpush1.bf16.msra.mxu0 0
    %372 = vmatprep.subr.bf16.mxu0 0
    %373 = vmatpush1.bf16.msra.mxu0 0
    %374 = vmatprep.subr.bf16.mxu0 0
    %375 = vmatpush1.bf16.msra.mxu0 0
    %376 = vmatprep.subr.bf16.mxu0 0
    %377 = vmatpush1.bf16.msra.mxu0 0
    %378 = vmatprep.subr.bf16.mxu0 0
    %379 = vmatpush1.bf16.msra.mxu0 0
    %380 = vmatprep.subr.bf16.mxu0 0
    %381 = vmatpush1.bf16.msra.mxu0 0
    %382 = vmatprep.subr.bf16.mxu0 0
    %383 = vmatpush1.bf16.msra.mxu0 0
    %384 = vmatprep.mubr.bf16.mxu0 0
    %385 = vmatmul.mubr.bf16.gmra.mrb[0].mxu0 %v350
    %v386 = vpop.f32.mrb[0].mxu0
    %v387 = vadd.f32 %v173, %v386
    %v388 = vpop.f32.mrb[0].mxu0
    %v389 = vpop.f32.mrb[0].mxu0
    %v390 = vpop.f32.mrb[0].mxu0
    %391 = vdwg.mxu0
    %v392 = vxor.u32 %v387, 2147483648
    %v393 = vmul.f32 %v392, 1.442695
    %v394 = vpow.pop %v393
    %v395 = vadd.f32 %v394, 1.0
    %v396 = vrcp.pop %v395
    %v397 = vmul.f32 1.0, %v396
    %v398 = vtanh.pop %v387
    %v399 = vmul.f32 %v397, 0.0
    %401 = vrot.lane.b32.xlu0 %v398, 64
    %v402 = vpop.permute.xlu0 %401
    %v404 = vmul.f32 %v397, %v402
    %406 = vrot.lane.b32.xlu0 %v404, 32
    %v407 = vpop.permute.xlu0 %406
    %v409 = vadd.f32 %v399, %v407
    %v410 = vtanh.pop %v409
    %412 = vrot.lane.b32.xlu0 %v410, 64
    %v413 = vpop.permute.xlu0 %412
    %v415 = vmul.f32 %v397, %v413
    %v416 = vpack.c.bf16 %v317, %v317
    %418 = vrot.lane.b32.xlu0 %v416, 32
    %v419 = vpop.permute.xlu0 %418
    %v421 = vrot.slane %v232, 2
    %v424 = vsel %vm250, %v419, 0
    %426 = vmatprep.subr.bf16.mxu0 0
    %427 = vmatpush1.bf16.msra.mxu0 %v246
    %428 = vmatprep.subr.bf16.mxu0 0
    %429 = vmatpush1.bf16.msra.mxu0 %v247
    %430 = vmatprep.subr.bf16.mxu0 0
    %431 = vmatpush1.bf16.msra.mxu0 0
    %432 = vmatprep.subr.bf16.mxu0 0
    %433 = vmatpush1.bf16.msra.mxu0 0
    %434 = vmatprep.subr.bf16.mxu0 0
    %435 = vmatpush1.bf16.msra.mxu0 0
    %436 = vmatprep.subr.bf16.mxu0 0
    %437 = vmatpush1.bf16.msra.mxu0 0
    %438 = vmatprep.subr.bf16.mxu0 0
    %439 = vmatpush1.bf16.msra.mxu0 0
    %440 = vmatprep.subr.bf16.mxu0 0
    %441 = vmatpush1.bf16.msra.mxu0 0
    %442 = vmatprep.subr.bf16.mxu0 0
    %443 = vmatpush1.bf16.msra.mxu0 0
    %444 = vmatprep.subr.bf16.mxu0 0
    %445 = vmatpush1.bf16.msra.mxu0 0
    %446 = vmatprep.subr.bf16.mxu0 0
    %447 = vmatpush1.bf16.msra.mxu0 0
    %448 = vmatprep.subr.bf16.mxu0 0
    %449 = vmatpush1.bf16.msra.mxu0 0
    %450 = vmatprep.subr.bf16.mxu0 0
    %451 = vmatpush1.bf16.msra.mxu0 0
    %452 = vmatprep.subr.bf16.mxu0 0
    %453 = vmatpush1.bf16.msra.mxu0 0
    %454 = vmatprep.subr.bf16.mxu0 0
    %455 = vmatpush1.bf16.msra.mxu0 0
    %456 = vmatprep.subr.bf16.mxu0 0
    %457 = vmatpush1.bf16.msra.mxu0 0
    %458 = vmatprep.mubr.bf16.mxu0 0
    %459 = vmatmul.mubr.bf16.gmra.mrb[0].mxu0 %v424
    %v460 = vpop.f32.mrb[0].mxu0
    %v461 = vadd.f32 %v421, %v460
    %v462 = vpop.f32.mrb[0].mxu0
    %v463 = vpop.f32.mrb[0].mxu0
    %v464 = vpop.f32.mrb[0].mxu0
    %465 = vdwg.mxu0
    %v466 = vxor.u32 %v461, 2147483648
    %v467 = vmul.f32 %v466, 1.442695
    %v468 = vpow.pop %v467
    %v469 = vadd.f32 %v468, 1.0
    %v470 = vrcp.pop %v469
    %v471 = vmul.f32 1.0, %v470
    %v472 = vtanh.pop %v461
    %v473 = vmul.f32 %v471, %v311
    %475 = vrot.lane.b32.xlu0 %v472, 64
    %v476 = vpop.permute.xlu0 %475
    %v478 = vmul.f32 %v471, %v476
    %480 = vrot.lane.b32.xlu0 %v478, 32
    %v481 = vpop.permute.xlu0 %480
    %v483 = vadd.f32 %v473, %v481
    %v484 = vtanh.pop %v483
    %486 = vrot.lane.b32.xlu0 %v484, 64
    %v487 = vpop.permute.xlu0 %486
    %v489 = vmul.f32 %v471, %v487
    %491 = vrot.lane.b32.xlu0 %v489, 32
    %v492 = vpop.permute.xlu0 %491
    %495 = vrot.lane.b32.xlu0 %v415, 64
    %v496 = vpop.permute.xlu0 %495
    %v498 = vsel %vm250, %v492, %v496
    %v499 = vpack.c.bf16 %v498, %v498
    %v501 = vsel %vm348, %v499, 0
    %503 = vmatprep.subr.bf16.mxu0 0
    %504 = vmatpush1.bf16.msra.mxu0 %v340
    %505 = vmatprep.subr.bf16.mxu0 0
    %506 = vmatpush1.bf16.msra.mxu0 %v341
    %507 = vmatprep.subr.bf16.mxu0 0
    %508 = vmatpush1.bf16.msra.mxu0 %v342
    %509 = vmatprep.subr.bf16.mxu0 0
    %510 = vmatpush1.bf16.msra.mxu0 %v343
    %511 = vmatprep.subr.bf16.mxu0 0
    %512 = vmatpush1.bf16.msra.mxu0 0
    %513 = vmatprep.subr.bf16.mxu0 0
    %514 = vmatpush1.bf16.msra.mxu0 0
    %515 = vmatprep.subr.bf16.mxu0 0
    %516 = vmatpush1.bf16.msra.mxu0 0
    %517 = vmatprep.subr.bf16.mxu0 0
    %518 = vmatpush1.bf16.msra.mxu0 0
    %519 = vmatprep.subr.bf16.mxu0 0
    %520 = vmatpush1.bf16.msra.mxu0 0
    %521 = vmatprep.subr.bf16.mxu0 0
    %522 = vmatpush1.bf16.msra.mxu0 0
    %523 = vmatprep.subr.bf16.mxu0 0
    %524 = vmatpush1.bf16.msra.mxu0 0
    %525 = vmatprep.subr.bf16.mxu0 0
    %526 = vmatpush1.bf16.msra.mxu0 0
    %527 = vmatprep.subr.bf16.mxu0 0
    %528 = vmatpush1.bf16.msra.mxu0 0
    %529 = vmatprep.subr.bf16.mxu0 0
    %530 = vmatpush1.bf16.msra.mxu0 0
    %531 = vmatprep.subr.bf16.mxu0 0
    %532 = vmatpush1.bf16.msra.mxu0 0
    %533 = vmatprep.subr.bf16.mxu0 0
    %534 = vmatpush1.bf16.msra.mxu0 0
    %535 = vmatprep.mubr.bf16.mxu0 0
    %536 = vmatmul.mubr.bf16.gmra.mrb[0].mxu0 %v501
    %v537 = vpop.f32.mrb[0].mxu0
    %v538 = vadd.f32 %v173, %v537
    %v539 = vpop.f32.mrb[0].mxu0
    %v540 = vpop.f32.mrb[0].mxu0
    %v541 = vpop.f32.mrb[0].mxu0
    %542 = vdwg.mxu0
    %v543 = vxor.u32 %v538, 2147483648
    %v544 = vmul.f32 %v543, 1.442695
    %v545 = vpow.pop %v544
    %v546 = vadd.f32 %v545, 1.0
    %v547 = vrcp.pop %v546
    %v548 = vmul.f32 1.0, %v547
    %v549 = vtanh.pop %v538
    %v550 = vmul.f32 %v548, %v409
    %552 = vrot.lane.b32.xlu0 %v549, 64
    %v553 = vpop.permute.xlu0 %552
    %v555 = vmul.f32 %v548, %v553
    %557 = vrot.lane.b32.xlu0 %v555, 32
    %v558 = vpop.permute.xlu0 %557
    %v560 = vadd.f32 %v550, %v558
    %v561 = vtanh.pop %v560
    %563 = vrot.lane.b32.xlu0 %v561, 64
    %v564 = vpop.permute.xlu0 %563
    %v566 = vmul.f32 %v548, %v564
    %v567 = vpack.c.bf16 %v489, %v489
    %569 = vrot.lane.b32.xlu0 %v567, 32
    %v570 = vpop.permute.xlu0 %569
    %v571 = vrot.slane %v232, 4
    %v574 = vsel %vm250, %v570, 0
    %576 = vmatprep.subr.bf16.mxu0 0
    %577 = vmatpush1.bf16.msra.mxu0 %v246
    %578 = vmatprep.subr.bf16.mxu0 0
    %579 = vmatpush1.bf16.msra.mxu0 %v247
    %580 = vmatprep.subr.bf16.mxu0 0
    %581 = vmatpush1.bf16.msra.mxu0 0
    %582 = vmatprep.subr.bf16.mxu0 0
    %583 = vmatpush1.bf16.msra.mxu0 0
    %584 = vmatprep.subr.bf16.mxu0 0
    %585 = vmatpush1.bf16.msra.mxu0 0
    %586 = vmatprep.subr.bf16.mxu0 0
    %587 = vmatpush1.bf16.msra.mxu0 0
    %588 = vmatprep.subr.bf16.mxu0 0
    %589 = vmatpush1.bf16.msra.mxu0 0
    %590 = vmatprep.subr.bf16.mxu0 0
    %591 = vmatpush1.bf16.msra.mxu0 0
    %592 = vmatprep.subr.bf16.mxu0 0
    %593 = vmatpush1.bf16.msra.mxu0 0
    %594 = vmatprep.subr.bf16.mxu0 0
    %595 = vmatpush1.bf16.msra.mxu0 0
    %596 = vmatprep.subr.bf16.mxu0 0
    %597 = vmatpush1.bf16.msra.mxu0 0
    %598 = vmatprep.subr.bf16.mxu0 0
    %599 = vmatpush1.bf16.msra.mxu0 0
    %600 = vmatprep.subr.bf16.mxu0 0
    %601 = vmatpush1.bf16.msra.mxu0 0
    %602 = vmatprep.subr.bf16.mxu0 0
    %603 = vmatpush1.bf16.msra.mxu0 0
    %604 = vmatprep.subr.bf16.mxu0 0
    %605 = vmatpush1.bf16.msra.mxu0 0
    %606 = vmatprep.subr.bf16.mxu0 0
    %607 = vmatpush1.bf16.msra.mxu0 0
    %608 = vmatprep.mubr.bf16.mxu0 0
    %609 = vmatmul.mubr.bf16.gmra.mrb[0].mxu0 %v574
    %v610 = vpop.f32.mrb[0].mxu0
    %v611 = vadd.f32 %v571, %v610
    %v612 = vpop.f32.mrb[0].mxu0
    %v613 = vpop.f32.mrb[0].mxu0
    %v614 = vpop.f32.mrb[0].mxu0
    %615 = vdwg.mxu0
    %v616 = vxor.u32 %v611, 2147483648
    %v617 = vmul.f32 %v616, 1.442695
    %v618 = vpow.pop %v617
    %v619 = vadd.f32 %v618, 1.0
    %v620 = vrcp.pop %v619
    %v621 = vmul.f32 1.0, %v620
    %v622 = vtanh.pop %v611
    %v623 = vmul.f32 %v621, %v483
    %625 = vrot.lane.b32.xlu0 %v622, 64
    %v626 = vpop.permute.xlu0 %625
    %v628 = vmul.f32 %v621, %v626
    %630 = vrot.lane.b32.xlu0 %v628, 32
    %v631 = vpop.permute.xlu0 %630
    %v633 = vadd.f32 %v623, %v631
    %v634 = vtanh.pop %v633
    %636 = vrot.lane.b32.xlu0 %v634, 64
    %v637 = vpop.permute.xlu0 %636
    %v639 = vmul.f32 %v621, %v637
    %641 = vrot.lane.b32.xlu0 %v639, 32
    %v642 = vpop.permute.xlu0 %641
    %645 = vrot.lane.b32.xlu0 %v566, 64
    %v646 = vpop.permute.xlu0 %645
    %v648 = vsel %vm250, %v642, %v646
    %v649 = vpack.c.bf16 %v648, %v648
    %v651 = vsel %vm348, %v649, 0
    %653 = vmatprep.subr.bf16.mxu0 0
    %654 = vmatpush1.bf16.msra.mxu0 %v340
    %655 = vmatprep.subr.bf16.mxu0 0
    %656 = vmatpush1.bf16.msra.mxu0 %v341
    %657 = vmatprep.subr.bf16.mxu0 0
    %658 = vmatpush1.bf16.msra.mxu0 %v342
    %659 = vmatprep.subr.bf16.mxu0 0
    %660 = vmatpush1.bf16.msra.mxu0 %v343
    %661 = vmatprep.subr.bf16.mxu0 0
    %662 = vmatpush1.bf16.msra.mxu0 0
    %663 = vmatprep.subr.bf16.mxu0 0
    %664 = vmatpush1.bf16.msra.mxu0 0
    %665 = vmatprep.subr.bf16.mxu0 0
    %666 = vmatpush1.bf16.msra.mxu0 0
    %667 = vmatprep.subr.bf16.mxu0 0
    %668 = vmatpush1.bf16.msra.mxu0 0
    %669 = vmatprep.subr.bf16.mxu0 0
    %670 = vmatpush1.bf16.msra.mxu0 0
    %671 = vmatprep.subr.bf16.mxu0 0
    %672 = vmatpush1.bf16.msra.mxu0 0
    %673 = vmatprep.subr.bf16.mxu0 0
    %674 = vmatpush1.bf16.msra.mxu0 0
    %675 = vmatprep.subr.bf16.mxu0 0
    %676 = vmatpush1.bf16.msra.mxu0 0
    %677 = vmatprep.subr.bf16.mxu0 0
    %678 = vmatpush1.bf16.msra.mxu0 0
    %679 = vmatprep.subr.bf16.mxu0 0
    %680 = vmatpush1.bf16.msra.mxu0 0
    %681 = vmatprep.subr.bf16.mxu0 0
    %682 = vmatpush1.bf16.msra.mxu0 0
    %683 = vmatprep.subr.bf16.mxu0 0
    %684 = vmatpush1.bf16.msra.mxu0 0
    %685 = vmatprep.mubr.bf16.mxu0 0
    %686 = vmatmul.mubr.bf16.gmra.mrb[0].mxu0 %v651
    %v687 = vpop.f32.mrb[0].mxu0
    %v688 = vadd.f32 %v173, %v687
    %v689 = vpop.f32.mrb[0].mxu0
    %v690 = vpop.f32.mrb[0].mxu0
    %v691 = vpop.f32.mrb[0].mxu0
    %692 = vdwg.mxu0
    %v693 = vxor.u32 %v688, 2147483648
    %v694 = vmul.f32 %v693, 1.442695
    %v695 = vpow.pop %v694
    %v696 = vadd.f32 %v695, 1.0
    %v697 = vrcp.pop %v696
    %v698 = vmul.f32 1.0, %v697
    %v699 = vtanh.pop %v688
    %v700 = vmul.f32 %v698, %v560
    %702 = vrot.lane.b32.xlu0 %v699, 64
    %v703 = vpop.permute.xlu0 %702
    %v705 = vmul.f32 %v698, %v703
    %707 = vrot.lane.b32.xlu0 %v705, 32
    %v708 = vpop.permute.xlu0 %707
    %v710 = vadd.f32 %v700, %v708
    %v711 = vtanh.pop %v710
    %713 = vrot.lane.b32.xlu0 %v711, 64
    %v714 = vpop.permute.xlu0 %713
    %v716 = vmul.f32 %v698, %v714
    %v717 = vpack.c.bf16 %v639, %v639
    %719 = vrot.lane.b32.xlu0 %v717, 32
    %v720 = vpop.permute.xlu0 %719
    %v721 = vrot.slane %v232, 6
    %v724 = vsel %vm250, %v720, 0
    %726 = vmatprep.subr.bf16.mxu0 0
    %727 = vmatpush1.bf16.msra.mxu0 %v246
    %728 = vmatprep.subr.bf16.mxu0 0
    %729 = vmatpush1.bf16.msra.mxu0 %v247
    %730 = vmatprep.subr.bf16.mxu0 0
    %731 = vmatpush1.bf16.msra.mxu0 0
    %732 = vmatprep.subr.bf16.mxu0 0
    %733 = vmatpush1.bf16.msra.mxu0 0
    %734 = vmatprep.subr.bf16.mxu0 0
    %735 = vmatpush1.bf16.msra.mxu0 0
    %736 = vmatprep.subr.bf16.mxu0 0
    %737 = vmatpush1.bf16.msra.mxu0 0
    %738 = vmatprep.subr.bf16.mxu0 0
    %739 = vmatpush1.bf16.msra.mxu0 0
    %740 = vmatprep.subr.bf16.mxu0 0
    %741 = vmatpush1.bf16.msra.mxu0 0
    %742 = vmatprep.subr.bf16.mxu0 0
    %743 = vmatpush1.bf16.msra.mxu0 0
    %744 = vmatprep.subr.bf16.mxu0 0
    %745 = vmatpush1.bf16.msra.mxu0 0
    %746 = vmatprep.subr.bf16.mxu0 0
    %747 = vmatpush1.bf16.msra.mxu0 0
    %748 = vmatprep.subr.bf16.mxu0 0
    %749 = vmatpush1.bf16.msra.mxu0 0
    %750 = vmatprep.subr.bf16.mxu0 0
    %751 = vmatpush1.bf16.msra.mxu0 0
    %752 = vmatprep.subr.bf16.mxu0 0
    %753 = vmatpush1.bf16.msra.mxu0 0
    %754 = vmatprep.subr.bf16.mxu0 0
    %755 = vmatpush1.bf16.msra.mxu0 0
    %756 = vmatprep.subr.bf16.mxu0 0
    %757 = vmatpush1.bf16.msra.mxu0 0
    %758 = vmatprep.mubr.bf16.mxu0 0
    %759 = vmatmul.mubr.bf16.gmra.mrb[0].mxu0 %v724
    %v760 = vpop.f32.mrb[0].mxu0
    %v761 = vadd.f32 %v721, %v760
    %v762 = vpop.f32.mrb[0].mxu0
    %v763 = vpop.f32.mrb[0].mxu0
    %v764 = vpop.f32.mrb[0].mxu0
    %765 = vdwg.mxu0
    %v766 = vxor.u32 %v761, 2147483648
    %v767 = vmul.f32 %v766, 1.442695
    %v768 = vpow.pop %v767
    %v769 = vadd.f32 %v768, 1.0
    %v770 = vrcp.pop %v769
    %v771 = vmul.f32 1.0, %v770
    %v772 = vtanh.pop %v761
    %v773 = vmul.f32 %v771, %v633
    %775 = vrot.lane.b32.xlu0 %v772, 64
    %v776 = vpop.permute.xlu0 %775
    %v778 = vmul.f32 %v771, %v776
    %780 = vrot.lane.b32.xlu0 %v778, 32
    %v781 = vpop.permute.xlu0 %780
    %v783 = vadd.f32 %v773, %v781
    %v784 = vtanh.pop %v783
    %786 = vrot.lane.b32.xlu0 %v784, 64
    %v787 = vpop.permute.xlu0 %786
    %v789 = vmul.f32 %v771, %v787
    %791 = vrot.lane.b32.xlu0 %v789, 32
    %v792 = vpop.permute.xlu0 %791
    %795 = vrot.lane.b32.xlu0 %v716, 64
    %v796 = vpop.permute.xlu0 %795
    %v798 = vsel %vm250, %v792, %v796
    %v799 = vpack.c.bf16 %v798, %v798
    %v801 = vsel %vm348, %v799, 0
    %803 = vmatprep.subr.bf16.mxu0 0
    %804 = vmatpush1.bf16.msra.mxu0 %v340
    %805 = vmatprep.subr.bf16.mxu0 0
    %806 = vmatpush1.bf16.msra.mxu0 %v341
    %807 = vmatprep.subr.bf16.mxu0 0
    %808 = vmatpush1.bf16.msra.mxu0 %v342
    %809 = vmatprep.subr.bf16.mxu0 0
    %810 = vmatpush1.bf16.msra.mxu0 %v343
    %811 = vmatprep.subr.bf16.mxu0 0
    %812 = vmatpush1.bf16.msra.mxu0 0
    %813 = vmatprep.subr.bf16.mxu0 0
    %814 = vmatpush1.bf16.msra.mxu0 0
    %815 = vmatprep.subr.bf16.mxu0 0
    %816 = vmatpush1.bf16.msra.mxu0 0
    %817 = vmatprep.subr.bf16.mxu0 0
    %818 = vmatpush1.bf16.msra.mxu0 0
    %819 = vmatprep.subr.bf16.mxu0 0
    %820 = vmatpush1.bf16.msra.mxu0 0
    %821 = vmatprep.subr.bf16.mxu0 0
    %822 = vmatpush1.bf16.msra.mxu0 0
    %823 = vmatprep.subr.bf16.mxu0 0
    %824 = vmatpush1.bf16.msra.mxu0 0
    %825 = vmatprep.subr.bf16.mxu0 0
    %826 = vmatpush1.bf16.msra.mxu0 0
    %827 = vmatprep.subr.bf16.mxu0 0
    %828 = vmatpush1.bf16.msra.mxu0 0
    %829 = vmatprep.subr.bf16.mxu0 0
    %830 = vmatpush1.bf16.msra.mxu0 0
    %831 = vmatprep.subr.bf16.mxu0 0
    %832 = vmatpush1.bf16.msra.mxu0 0
    %833 = vmatprep.subr.bf16.mxu0 0
    %834 = vmatpush1.bf16.msra.mxu0 0
    %835 = vmatprep.mubr.bf16.mxu0 0
    %836 = vmatmul.mubr.bf16.gmra.mrb[0].mxu0 %v801
    %v837 = vpop.f32.mrb[0].mxu0
    %v838 = vadd.f32 %v173, %v837
    %v839 = vpop.f32.mrb[0].mxu0
    %v840 = vpop.f32.mrb[0].mxu0
    %v841 = vpop.f32.mrb[0].mxu0
    %842 = vdwg.mxu0
    %v843 = vxor.u32 %v838, 2147483648
    %v844 = vmul.f32 %v843, 1.442695
    %v845 = vpow.pop %v844
    %v846 = vadd.f32 %v845, 1.0
    %v847 = vrcp.pop %v846
    %v848 = vmul.f32 1.0, %v847
    %v849 = vtanh.pop %v838
    %v850 = vmul.f32 %v848, %v710
    %852 = vrot.lane.b32.xlu0 %v849, 64
    %v853 = vpop.permute.xlu0 %852
    %v855 = vmul.f32 %v848, %v853
    %857 = vrot.lane.b32.xlu0 %v855, 32
    %v858 = vpop.permute.xlu0 %857
    %v860 = vadd.f32 %v850, %v858
    %v861 = vtanh.pop %v860
    %863 = vrot.lane.b32.xlu0 %v861, 64
    %v864 = vpop.permute.xlu0 %863
    %v866 = vmul.f32 %v848, %v864
    %v867 = vpack.c.bf16 %v789, %v789
    %869 = vrot.lane.b32.xlu0 %v867, 32
    %v870 = vpop.permute.xlu0 %869
    %v872 = vsel %vm250, %v870, 0
    %874 = vmatprep.subr.bf16.mxu0 0
    %875 = vmatpush1.bf16.msra.mxu0 %v246
    %876 = vmatprep.subr.bf16.mxu0 0
    %877 = vmatpush1.bf16.msra.mxu0 %v247
    %878 = vmatprep.subr.bf16.mxu0 0
    %879 = vmatpush1.bf16.msra.mxu0 0
    %880 = vmatprep.subr.bf16.mxu0 0
    %881 = vmatpush1.bf16.msra.mxu0 0
    %882 = vmatprep.subr.bf16.mxu0 0
    %883 = vmatpush1.bf16.msra.mxu0 0
    %884 = vmatprep.subr.bf16.mxu0 0
    %885 = vmatpush1.bf16.msra.mxu0 0
    %886 = vmatprep.subr.bf16.mxu0 0
    %887 = vmatpush1.bf16.msra.mxu0 0
    %888 = vmatprep.subr.bf16.mxu0 0
    %889 = vmatpush1.bf16.msra.mxu0 0
    %890 = vmatprep.subr.bf16.mxu0 0
    %891 = vmatpush1.bf16.msra.mxu0 0
    %892 = vmatprep.subr.bf16.mxu0 0
    %893 = vmatpush1.bf16.msra.mxu0 0
    %894 = vmatprep.subr.bf16.mxu0 0
    %895 = vmatpush1.bf16.msra.mxu0 0
    %896 = vmatprep.subr.bf16.mxu0 0
    %897 = vmatpush1.bf16.msra.mxu0 0
    %898 = vmatprep.subr.bf16.mxu0 0
    %899 = vmatpush1.bf16.msra.mxu0 0
    %900 = vmatprep.subr.bf16.mxu0 0
    %901 = vmatpush1.bf16.msra.mxu0 0
    %902 = vmatprep.subr.bf16.mxu0 0
    %903 = vmatpush1.bf16.msra.mxu0 0
    %904 = vmatprep.subr.bf16.mxu0 0
    %905 = vmatpush1.bf16.msra.mxu0 0
    %906 = vmatprep.mubr.bf16.mxu0 0
    %907 = vmatmul.mubr.bf16.gmra.mrb[0].mxu0 %v872
    %v908 = vpop.f32.mrb[0].mxu0
    %v909 = vadd.f32 %v235, %v908
    %v910 = vpop.f32.mrb[0].mxu0
    %v911 = vpop.f32.mrb[0].mxu0
    %v912 = vpop.f32.mrb[0].mxu0
    %913 = vdwg.mxu0
    %v914 = vxor.u32 %v909, 2147483648
    %v915 = vmul.f32 %v914, 1.442695
    %v916 = vpow.pop %v915
    %v917 = vadd.f32 %v916, 1.0
    %v918 = vrcp.pop %v917
    %v919 = vmul.f32 1.0, %v918
    %v920 = vtanh.pop %v909
    %v921 = vmul.f32 %v919, %v783
    %923 = vrot.lane.b32.xlu0 %v920, 64
    %v924 = vpop.permute.xlu0 %923
    %v926 = vmul.f32 %v919, %v924
    %928 = vrot.lane.b32.xlu0 %v926, 32
    %v929 = vpop.permute.xlu0 %928
    %v931 = vadd.f32 %v921, %v929
    %v932 = vtanh.pop %v931
    %934 = vrot.lane.b32.xlu0 %v932, 64
    %v935 = vpop.permute.xlu0 %934
    %v937 = vmul.f32 %v919, %v935
    %939 = vrot.lane.b32.xlu0 %v937, 32
    %v940 = vpop.permute.xlu0 %939
    %943 = vrot.lane.b32.xlu0 %v866, 64
    %v944 = vpop.permute.xlu0 %943
    %v946 = vsel %vm250, %v940, %v944
    %v947 = vpack.c.bf16 %v946, %v946
    %v949 = vsel %vm348, %v947, 0
    %951 = vmatprep.subr.bf16.mxu0 0
    %952 = vmatpush1.bf16.msra.mxu0 %v340
    %953 = vmatprep.subr.bf16.mxu0 0
    %954 = vmatpush1.bf16.msra.mxu0 %v341
    %955 = vmatprep.subr.bf16.mxu0 0
    %956 = vmatpush1.bf16.msra.mxu0 %v342
    %957 = vmatprep.subr.bf16.mxu0 0
    %958 = vmatpush1.bf16.msra.mxu0 %v343
    %959 = vmatprep.subr.bf16.mxu0 0
    %960 = vmatpush1.bf16.msra.mxu0 0
    %961 = vmatprep.subr.bf16.mxu0 0
    %962 = vmatpush1.bf16.msra.mxu0 0
    %963 = vmatprep.subr.bf16.mxu0 0
    %964 = vmatpush1.bf16.msra.mxu0 0
    %965 = vmatprep.subr.bf16.mxu0 0
    %966 = vmatpush1.bf16.msra.mxu0 0
    %967 = vmatprep.subr.bf16.mxu0 0
    %968 = vmatpush1.bf16.msra.mxu0 0
    %969 = vmatprep.subr.bf16.mxu0 0
    %970 = vmatpush1.bf16.msra.mxu0 0
    %971 = vmatprep.subr.bf16.mxu0 0
    %972 = vmatpush1.bf16.msra.mxu0 0
    %973 = vmatprep.subr.bf16.mxu0 0
    %974 = vmatpush1.bf16.msra.mxu0 0
    %975 = vmatprep.subr.bf16.mxu0 0
    %976 = vmatpush1.bf16.msra.mxu0 0
    %977 = vmatprep.subr.bf16.mxu0 0
    %978 = vmatpush1.bf16.msra.mxu0 0
    %979 = vmatprep.subr.bf16.mxu0 0
    %980 = vmatpush1.bf16.msra.mxu0 0
    %981 = vmatprep.subr.bf16.mxu0 0
    %982 = vmatpush1.bf16.msra.mxu0 0
    %983 = vmatprep.mubr.bf16.mxu0 0
    %984 = vmatmul.mubr.bf16.gmra.mrb[0].mxu0 %v949
    %v985 = vpop.f32.mrb[0].mxu0
    %v986 = vadd.f32 %v173, %v985
    %v987 = vpop.f32.mrb[0].mxu0
    %v988 = vpop.f32.mrb[0].mxu0
    %v989 = vpop.f32.mrb[0].mxu0
    %990 = vdwg.mxu0
    %v991 = vxor.u32 %v986, 2147483648
    %v992 = vmul.f32 %v991, 1.442695
    %v993 = vpow.pop %v992
    %v994 = vadd.f32 %v993, 1.0
    %v995 = vrcp.pop %v994
    %v996 = vmul.f32 1.0, %v995
    %v997 = vtanh.pop %v986
    %v998 = vmul.f32 %v996, %v860
    %1000 = vrot.lane.b32.xlu0 %v997, 64
    %v1001 = vpop.permute.xlu0 %1000
    %v1003 = vmul.f32 %v996, %v1001
    %1005 = vrot.lane.b32.xlu0 %v1003, 32
    %v1006 = vpop.permute.xlu0 %1005
    %v1008 = vadd.f32 %v998, %v1006
    %v1009 = vtanh.pop %v1008
    %1011 = vrot.lane.b32.xlu0 %v1009, 64
    %v1012 = vpop.permute.xlu0 %1011
    %v1014 = vmul.f32 %v996, %v1012
    %v1015 = vpack.c.bf16 %v937, %v937
    %1017 = vrot.lane.b32.xlu0 %v1015, 32
    %v1018 = vpop.permute.xlu0 %1017
    %v1020 = vrot.slane %v235, 2
    %v1023 = vsel %vm250, %v1018, 0
    %1025 = vmatprep.subr.bf16.mxu0 0
    %1026 = vmatpush1.bf16.msra.mxu0 %v246
    %1027 = vmatprep.subr.bf16.mxu0 0
    %1028 = vmatpush1.bf16.msra.mxu0 %v247
    %1029 = vmatprep.subr.bf16.mxu0 0
    %1030 = vmatpush1.bf16.msra.mxu0 0
    %1031 = vmatprep.subr.bf16.mxu0 0
    %1032 = vmatpush1.bf16.msra.mxu0 0
    %1033 = vmatprep.subr.bf16.mxu0 0
    %1034 = vmatpush1.bf16.msra.mxu0 0
    %1035 = vmatprep.subr.bf16.mxu0 0
    %1036 = vmatpush1.bf16.msra.mxu0 0
    %1037 = vmatprep.subr.bf16.mxu0 0
    %1038 = vmatpush1.bf16.msra.mxu0 0
    %1039 = vmatprep.subr.bf16.mxu0 0
    %1040 = vmatpush1.bf16.msra.mxu0 0
    %1041 = vmatprep.subr.bf16.mxu0 0
    %1042 = vmatpush1.bf16.msra.mxu0 0
    %1043 = vmatprep.subr.bf16.mxu0 0
    %1044 = vmatpush1.bf16.msra.mxu0 0
    %1045 = vmatprep.subr.bf16.mxu0 0
    %1046 = vmatpush1.bf16.msra.mxu0 0
    %1047 = vmatprep.subr.bf16.mxu0 0
    %1048 = vmatpush1.bf16.msra.mxu0 0
    %1049 = vmatprep.subr.bf16.mxu0 0
    %1050 = vmatpush1.bf16.msra.mxu0 0
    %1051 = vmatprep.subr.bf16.mxu0 0
    %1052 = vmatpush1.bf16.msra.mxu0 0
    %1053 = vmatprep.subr.bf16.mxu0 0
    %1054 = vmatpush1.bf16.msra.mxu0 0
    %1055 = vmatprep.subr.bf16.mxu0 0
    %1056 = vmatpush1.bf16.msra.mxu0 0
    %1057 = vmatprep.mubr.bf16.mxu0 0
    %1058 = vmatmul.mubr.bf16.gmra.mrb[0].mxu0 %v1023
    %v1059 = vpop.f32.mrb[0].mxu0
    %v1060 = vadd.f32 %v1020, %v1059
    %v1061 = vpop.f32.mrb[0].mxu0
    %v1062 = vpop.f32.mrb[0].mxu0
    %v1063 = vpop.f32.mrb[0].mxu0
    %1064 = vdwg.mxu0
    %v1065 = vxor.u32 %v1060, 2147483648
    %v1066 = vmul.f32 %v1065, 1.442695
    %v1067 = vpow.pop %v1066
    %v1068 = vadd.f32 %v1067, 1.0
    %v1069 = vrcp.pop %v1068
    %v1070 = vmul.f32 1.0, %v1069
    %v1071 = vtanh.pop %v1060
    %v1072 = vmul.f32 %v1070, %v931
    %1074 = vrot.lane.b32.xlu0 %v1071, 64
    %v1075 = vpop.permute.xlu0 %1074
    %v1077 = vmul.f32 %v1070, %v1075
    %1079 = vrot.lane.b32.xlu0 %v1077, 32
    %v1080 = vpop.permute.xlu0 %1079
    %v1082 = vadd.f32 %v1072, %v1080
    %v1083 = vtanh.pop %v1082
    %1085 = vrot.lane.b32.xlu0 %v1083, 64
    %v1086 = vpop.permute.xlu0 %1085
    %v1088 = vmul.f32 %v1070, %v1086
    %1090 = vrot.lane.b32.xlu0 %v1088, 32
    %v1091 = vpop.permute.xlu0 %1090
    %1094 = vrot.lane.b32.xlu0 %v1014, 64
    %v1095 = vpop.permute.xlu0 %1094
    %v1097 = vsel %vm250, %v1091, %v1095
    %v1098 = vpack.c.bf16 %v1097, %v1097
    %v1100 = vsel %vm348, %v1098, 0
    %1102 = vmatprep.subr.bf16.mxu0 0
    %1103 = vmatpush1.bf16.msra.mxu0 %v340
    %1104 = vmatprep.subr.bf16.mxu0 0
    %1105 = vmatpush1.bf16.msra.mxu0 %v341
    %1106 = vmatprep.subr.bf16.mxu0 0
    %1107 = vmatpush1.bf16.msra.mxu0 %v342
    %1108 = vmatprep.subr.bf16.mxu0 0
    %1109 = vmatpush1.bf16.msra.mxu0 %v343
    %1110 = vmatprep.subr.bf16.mxu0 0
    %1111 = vmatpush1.bf16.msra.mxu0 0
    %1112 = vmatprep.subr.bf16.mxu0 0
    %1113 = vmatpush1.bf16.msra.mxu0 0
    %1114 = vmatprep.subr.bf16.mxu0 0
    %1115 = vmatpush1.bf16.msra.mxu0 0
    %1116 = vmatprep.subr.bf16.mxu0 0
    %1117 = vmatpush1.bf16.msra.mxu0 0
    %1118 = vmatprep.subr.bf16.mxu0 0
    %1119 = vmatpush1.bf16.msra.mxu0 0
    %1120 = vmatprep.subr.bf16.mxu0 0
    %1121 = vmatpush1.bf16.msra.mxu0 0
    %1122 = vmatprep.subr.bf16.mxu0 0
    %1123 = vmatpush1.bf16.msra.mxu0 0
    %1124 = vmatprep.subr.bf16.mxu0 0
    %1125 = vmatpush1.bf16.msra.mxu0 0
    %1126 = vmatprep.subr.bf16.mxu0 0
    %1127 = vmatpush1.bf16.msra.mxu0 0
    %1128 = vmatprep.subr.bf16.mxu0 0
    %1129 = vmatpush1.bf16.msra.mxu0 0
    %1130 = vmatprep.subr.bf16.mxu0 0
    %1131 = vmatpush1.bf16.msra.mxu0 0
    %1132 = vmatprep.subr.bf16.mxu0 0
    %1133 = vmatpush1.bf16.msra.mxu0 0
    %1134 = vmatprep.mubr.bf16.mxu0 0
    %1135 = vmatmul.mubr.bf16.gmra.mrb[0].mxu0 %v1100
    %v1136 = vpop.f32.mrb[0].mxu0
    %v1137 = vadd.f32 %v173, %v1136
    %v1138 = vpop.f32.mrb[0].mxu0
    %v1139 = vpop.f32.mrb[0].mxu0
    %v1140 = vpop.f32.mrb[0].mxu0
    %1141 = vdwg.mxu0
    %v1142 = vxor.u32 %v1137, 2147483648
    %v1143 = vmul.f32 %v1142, 1.442695
    %v1144 = vpow.pop %v1143
    %v1145 = vadd.f32 %v1144, 1.0
    %v1146 = vrcp.pop %v1145
    %v1147 = vmul.f32 1.0, %v1146
    %v1148 = vtanh.pop %v1137
    %v1149 = vmul.f32 %v1147, %v1008
    %1151 = vrot.lane.b32.xlu0 %v1148, 64
    %v1152 = vpop.permute.xlu0 %1151
    %v1154 = vmul.f32 %v1147, %v1152
    %1156 = vrot.lane.b32.xlu0 %v1154, 32
    %v1157 = vpop.permute.xlu0 %1156
    %v1159 = vadd.f32 %v1149, %v1157
    %v1160 = vtanh.pop %v1159
    %1162 = vrot.lane.b32.xlu0 %v1160, 64
    %v1163 = vpop.permute.xlu0 %1162
    %v1165 = vmul.f32 %v1147, %v1163
    %v1166 = vpack.c.bf16 %v1088, %v1088
    %1168 = vrot.lane.b32.xlu0 %v1166, 32
    %v1169 = vpop.permute.xlu0 %1168
    %v1170 = vrot.slane %v235, 4
    %v1173 = vsel %vm250, %v1169, 0
    %1175 = vmatprep.subr.bf16.mxu0 0
    %1176 = vmatpush1.bf16.msra.mxu0 %v246
    %1177 = vmatprep.subr.bf16.mxu0 0
    %1178 = vmatpush1.bf16.msra.mxu0 %v247
    %1179 = vmatprep.subr.bf16.mxu0 0
    %1180 = vmatpush1.bf16.msra.mxu0 0
    %1181 = vmatprep.subr.bf16.mxu0 0
    %1182 = vmatpush1.bf16.msra.mxu0 0
    %1183 = vmatprep.subr.bf16.mxu0 0
    %1184 = vmatpush1.bf16.msra.mxu0 0
    %1185 = vmatprep.subr.bf16.mxu0 0
    %1186 = vmatpush1.bf16.msra.mxu0 0
    %1187 = vmatprep.subr.bf16.mxu0 0
    %1188 = vmatpush1.bf16.msra.mxu0 0
    %1189 = vmatprep.subr.bf16.mxu0 0
    %1190 = vmatpush1.bf16.msra.mxu0 0
    %1191 = vmatprep.subr.bf16.mxu0 0
    %1192 = vmatpush1.bf16.msra.mxu0 0
    %1193 = vmatprep.subr.bf16.mxu0 0
    %1194 = vmatpush1.bf16.msra.mxu0 0
    %1195 = vmatprep.subr.bf16.mxu0 0
    %1196 = vmatpush1.bf16.msra.mxu0 0
    %1197 = vmatprep.subr.bf16.mxu0 0
    %1198 = vmatpush1.bf16.msra.mxu0 0
    %1199 = vmatprep.subr.bf16.mxu0 0
    %1200 = vmatpush1.bf16.msra.mxu0 0
    %1201 = vmatprep.subr.bf16.mxu0 0
    %1202 = vmatpush1.bf16.msra.mxu0 0
    %1203 = vmatprep.subr.bf16.mxu0 0
    %1204 = vmatpush1.bf16.msra.mxu0 0
    %1205 = vmatprep.subr.bf16.mxu0 0
    %1206 = vmatpush1.bf16.msra.mxu0 0
    %1207 = vmatprep.mubr.bf16.mxu0 0
    %1208 = vmatmul.mubr.bf16.gmra.mrb[0].mxu0 %v1173
    %v1209 = vpop.f32.mrb[0].mxu0
    %v1210 = vadd.f32 %v1170, %v1209
    %v1211 = vpop.f32.mrb[0].mxu0
    %v1212 = vpop.f32.mrb[0].mxu0
    %v1213 = vpop.f32.mrb[0].mxu0
    %1214 = vdwg.mxu0
    %v1215 = vxor.u32 %v1210, 2147483648
    %v1216 = vmul.f32 %v1215, 1.442695
    %v1217 = vpow.pop %v1216
    %v1218 = vadd.f32 %v1217, 1.0
    %v1219 = vrcp.pop %v1218
    %v1220 = vmul.f32 1.0, %v1219
    %v1221 = vtanh.pop %v1210
    %v1222 = vmul.f32 %v1220, %v1082
    %1224 = vrot.lane.b32.xlu0 %v1221, 64
    %v1225 = vpop.permute.xlu0 %1224
    %v1227 = vmul.f32 %v1220, %v1225
    %1229 = vrot.lane.b32.xlu0 %v1227, 32
    %v1230 = vpop.permute.xlu0 %1229
    %v1232 = vadd.f32 %v1222, %v1230
    %v1233 = vtanh.pop %v1232
    %1235 = vrot.lane.b32.xlu0 %v1233, 64
    %v1236 = vpop.permute.xlu0 %1235
    %v1238 = vmul.f32 %v1220, %v1236
    %1240 = vrot.lane.b32.xlu0 %v1238, 32
    %v1241 = vpop.permute.xlu0 %1240
    %1244 = vrot.lane.b32.xlu0 %v1165, 64
    %v1245 = vpop.permute.xlu0 %1244
    %v1247 = vsel %vm250, %v1241, %v1245
    %v1248 = vpack.c.bf16 %v1247, %v1247
    %v1250 = vsel %vm348, %v1248, 0
    %1252 = vmatprep.subr.bf16.mxu0 0
    %1253 = vmatpush1.bf16.msra.mxu0 %v340
    %1254 = vmatprep.subr.bf16.mxu0 0
    %1255 = vmatpush1.bf16.msra.mxu0 %v341
    %1256 = vmatprep.subr.bf16.mxu0 0
    %1257 = vmatpush1.bf16.msra.mxu0 %v342
    %1258 = vmatprep.subr.bf16.mxu0 0
    %1259 = vmatpush1.bf16.msra.mxu0 %v343
    %1260 = vmatprep.subr.bf16.mxu0 0
    %1261 = vmatpush1.bf16.msra.mxu0 0
    %1262 = vmatprep.subr.bf16.mxu0 0
    %1263 = vmatpush1.bf16.msra.mxu0 0
    %1264 = vmatprep.subr.bf16.mxu0 0
    %1265 = vmatpush1.bf16.msra.mxu0 0
    %1266 = vmatprep.subr.bf16.mxu0 0
    %1267 = vmatpush1.bf16.msra.mxu0 0
    %1268 = vmatprep.subr.bf16.mxu0 0
    %1269 = vmatpush1.bf16.msra.mxu0 0
    %1270 = vmatprep.subr.bf16.mxu0 0
    %1271 = vmatpush1.bf16.msra.mxu0 0
    %1272 = vmatprep.subr.bf16.mxu0 0
    %1273 = vmatpush1.bf16.msra.mxu0 0
    %1274 = vmatprep.subr.bf16.mxu0 0
    %1275 = vmatpush1.bf16.msra.mxu0 0
    %1276 = vmatprep.subr.bf16.mxu0 0
    %1277 = vmatpush1.bf16.msra.mxu0 0
    %1278 = vmatprep.subr.bf16.mxu0 0
    %1279 = vmatpush1.bf16.msra.mxu0 0
    %1280 = vmatprep.subr.bf16.mxu0 0
    %1281 = vmatpush1.bf16.msra.mxu0 0
    %1282 = vmatprep.subr.bf16.mxu0 0
    %1283 = vmatpush1.bf16.msra.mxu0 0
    %1284 = vmatprep.mubr.bf16.mxu0 0
    %1285 = vmatmul.mubr.bf16.gmra.mrb[0].mxu0 %v1250
    %v1286 = vpop.f32.mrb[0].mxu0
    %v1287 = vadd.f32 %v173, %v1286
    %v1288 = vpop.f32.mrb[0].mxu0
    %v1289 = vpop.f32.mrb[0].mxu0
    %v1290 = vpop.f32.mrb[0].mxu0
    %1291 = vdwg.mxu0
    %v1292 = vxor.u32 %v1287, 2147483648
    %v1293 = vmul.f32 %v1292, 1.442695
    %v1294 = vpow.pop %v1293
    %v1295 = vadd.f32 %v1294, 1.0
    %v1296 = vrcp.pop %v1295
    %v1297 = vmul.f32 1.0, %v1296
    %v1298 = vtanh.pop %v1287
    %v1299 = vmul.f32 %v1297, %v1159
    %1301 = vrot.lane.b32.xlu0 %v1298, 64
    %v1302 = vpop.permute.xlu0 %1301
    %v1304 = vmul.f32 %v1297, %v1302
    %1306 = vrot.lane.b32.xlu0 %v1304, 32
    %v1307 = vpop.permute.xlu0 %1306
    %v1309 = vadd.f32 %v1299, %v1307
    %v1310 = vtanh.pop %v1309
    %1312 = vrot.lane.b32.xlu0 %v1310, 64
    %v1313 = vpop.permute.xlu0 %1312
    %v1315 = vmul.f32 %v1297, %v1313
    %v1316 = vpack.c.bf16 %v1238, %v1238
    %1318 = vrot.lane.b32.xlu0 %v1316, 32
    %v1319 = vpop.permute.xlu0 %1318
    %v1320 = vrot.slane %v235, 6
    %v1323 = vsel %vm250, %v1319, 0
    %1325 = vmatprep.subr.bf16.mxu0 0
    %1326 = vmatpush1.bf16.msra.mxu0 %v246
    %1327 = vmatprep.subr.bf16.mxu0 0
    %1328 = vmatpush1.bf16.msra.mxu0 %v247
    %1329 = vmatprep.subr.bf16.mxu0 0
    %1330 = vmatpush1.bf16.msra.mxu0 0
    %1331 = vmatprep.subr.bf16.mxu0 0
    %1332 = vmatpush1.bf16.msra.mxu0 0
    %1333 = vmatprep.subr.bf16.mxu0 0
    %1334 = vmatpush1.bf16.msra.mxu0 0
    %1335 = vmatprep.subr.bf16.mxu0 0
    %1336 = vmatpush1.bf16.msra.mxu0 0
    %1337 = vmatprep.subr.bf16.mxu0 0
    %1338 = vmatpush1.bf16.msra.mxu0 0
    %1339 = vmatprep.subr.bf16.mxu0 0
    %1340 = vmatpush1.bf16.msra.mxu0 0
    %1341 = vmatprep.subr.bf16.mxu0 0
    %1342 = vmatpush1.bf16.msra.mxu0 0
    %1343 = vmatprep.subr.bf16.mxu0 0
    %1344 = vmatpush1.bf16.msra.mxu0 0
    %1345 = vmatprep.subr.bf16.mxu0 0
    %1346 = vmatpush1.bf16.msra.mxu0 0
    %1347 = vmatprep.subr.bf16.mxu0 0
    %1348 = vmatpush1.bf16.msra.mxu0 0
    %1349 = vmatprep.subr.bf16.mxu0 0
    %1350 = vmatpush1.bf16.msra.mxu0 0
    %1351 = vmatprep.subr.bf16.mxu0 0
    %1352 = vmatpush1.bf16.msra.mxu0 0
    %1353 = vmatprep.subr.bf16.mxu0 0
    %1354 = vmatpush1.bf16.msra.mxu0 0
    %1355 = vmatprep.subr.bf16.mxu0 0
    %1356 = vmatpush1.bf16.msra.mxu0 0
    %1357 = vmatprep.mubr.bf16.mxu0 0
    %1358 = vmatmul.mubr.bf16.gmra.mrb[0].mxu0 %v1323
    %v1359 = vpop.f32.mrb[0].mxu0
    %v1360 = vadd.f32 %v1320, %v1359
    %v1361 = vpop.f32.mrb[0].mxu0
    %v1362 = vpop.f32.mrb[0].mxu0
    %v1363 = vpop.f32.mrb[0].mxu0
    %1364 = vdwg.mxu0
    %v1365 = vxor.u32 %v1360, 2147483648
    %v1366 = vmul.f32 %v1365, 1.442695
    %v1367 = vpow.pop %v1366
    %v1368 = vadd.f32 %v1367, 1.0
    %v1369 = vrcp.pop %v1368
    %v1370 = vmul.f32 1.0, %v1369
    %v1371 = vtanh.pop %v1360
    %v1372 = vmul.f32 %v1370, %v1232
    %1374 = vrot.lane.b32.xlu0 %v1371, 64
    %v1375 = vpop.permute.xlu0 %1374
    %v1377 = vmul.f32 %v1370, %v1375
    %1379 = vrot.lane.b32.xlu0 %v1377, 32
    %v1380 = vpop.permute.xlu0 %1379
    %v1382 = vadd.f32 %v1372, %v1380
    %v1383 = vtanh.pop %v1382
    %1385 = vrot.lane.b32.xlu0 %v1383, 64
    %v1386 = vpop.permute.xlu0 %1385
    %v1388 = vmul.f32 %v1370, %v1386
    %1390 = vrot.lane.b32.xlu0 %v1388, 32
    %v1391 = vpop.permute.xlu0 %1390
    %1394 = vrot.lane.b32.xlu0 %v1315, 64
    %v1395 = vpop.permute.xlu0 %1394
    %v1397 = vsel %vm250, %v1391, %v1395
    %v1398 = vpack.c.bf16 %v1397, %v1397
    %v1400 = vsel %vm348, %v1398, 0
    %1402 = vmatprep.subr.bf16.mxu0 0
    %1403 = vmatpush1.bf16.msra.mxu0 %v340
    %1404 = vmatprep.subr.bf16.mxu0 0
    %1405 = vmatpush1.bf16.msra.mxu0 %v341
    %1406 = vmatprep.subr.bf16.mxu0 0
    %1407 = vmatpush1.bf16.msra.mxu0 %v342
    %1408 = vmatprep.subr.bf16.mxu0 0
    %1409 = vmatpush1.bf16.msra.mxu0 %v343
    %1410 = vmatprep.subr.bf16.mxu0 0
    %1411 = vmatpush1.bf16.msra.mxu0 0
    %1412 = vmatprep.subr.bf16.mxu0 0
    %1413 = vmatpush1.bf16.msra.mxu0 0
    %1414 = vmatprep.subr.bf16.mxu0 0
    %1415 = vmatpush1.bf16.msra.mxu0 0
    %1416 = vmatprep.subr.bf16.mxu0 0
    %1417 = vmatpush1.bf16.msra.mxu0 0
    %1418 = vmatprep.subr.bf16.mxu0 0
    %1419 = vmatpush1.bf16.msra.mxu0 0
    %1420 = vmatprep.subr.bf16.mxu0 0
    %1421 = vmatpush1.bf16.msra.mxu0 0
    %1422 = vmatprep.subr.bf16.mxu0 0
    %1423 = vmatpush1.bf16.msra.mxu0 0
    %1424 = vmatprep.subr.bf16.mxu0 0
    %1425 = vmatpush1.bf16.msra.mxu0 0
    %1426 = vmatprep.subr.bf16.mxu0 0
    %1427 = vmatpush1.bf16.msra.mxu0 0
    %1428 = vmatprep.subr.bf16.mxu0 0
    %1429 = vmatpush1.bf16.msra.mxu0 0
    %1430 = vmatprep.subr.bf16.mxu0 0
    %1431 = vmatpush1.bf16.msra.mxu0 0
    %1432 = vmatprep.subr.bf16.mxu0 0
    %1433 = vmatpush1.bf16.msra.mxu0 0
    %1434 = vmatprep.mubr.bf16.mxu0 0
    %1435 = vmatmul.mubr.bf16.gmra.mrb[0].mxu0 %v1400
    %v1436 = vpop.f32.mrb[0].mxu0
    %v1437 = vadd.f32 %v173, %v1436
    %v1438 = vpop.f32.mrb[0].mxu0
    %v1439 = vpop.f32.mrb[0].mxu0
    %v1440 = vpop.f32.mrb[0].mxu0
    %1441 = vdwg.mxu0
    %v1442 = vxor.u32 %v1437, 2147483648
    %v1443 = vmul.f32 %v1442, 1.442695
    %v1444 = vpow.pop %v1443
    %v1445 = vadd.f32 %v1444, 1.0
    %v1446 = vrcp.pop %v1445
    %v1447 = vmul.f32 1.0, %v1446
    %v1448 = vtanh.pop %v1437
    %v1449 = vmul.f32 %v1447, %v1309
    %1451 = vrot.lane.b32.xlu0 %v1448, 64
    %v1452 = vpop.permute.xlu0 %1451
    %v1454 = vmul.f32 %v1447, %v1452
    %1456 = vrot.lane.b32.xlu0 %v1454, 32
    %v1457 = vpop.permute.xlu0 %1456
    %v1459 = vadd.f32 %v1449, %v1457
    %v1460 = vtanh.pop %v1459
    %1462 = vrot.lane.b32.xlu0 %v1460, 64
    %v1463 = vpop.permute.xlu0 %1462
    %v1465 = vmul.f32 %v1447, %v1463
    %v1466 = vld [vmem:[#allocation10] sm:$0xf]
    %v1467 = vld [vmem:[#allocation10 + $0x4] sm:$0xf]
    %v1468 = vld [vmem:[#allocation10 + $0x8] sm:$0xf]
    %v1469 = vld [vmem:[#allocation10 + $0xc] sm:$0xf]
    %v1470 = vld [vmem:[#allocation12] sm:$0xf]
    %v1471 = vld [vmem:[#allocation12 + $0x4] sm:$0xf]
    %v1472 = vld [vmem:[#allocation12 + $0x8] sm:$0xf]
    %v1473 = vld [vmem:[#allocation12 + $0xc] sm:$0xf]
    %v1474 = vld [vmem:[#allocation12 + $0x10] sm:$0xf]
    %v1475 = vld [vmem:[#allocation12 + $0x14] sm:$0xf]
    %v1476 = vld [vmem:[#allocation12 + $0x18] sm:$0xf]
    %v1477 = vld [vmem:[#allocation12 + $0x1c] sm:$0xf]
    %v1478 = vld [vmem:[%s10] sm:$0x1]
    %v1480 = vlaneseq
    %v1481 = vshrl.u32 %v1480, 7
    %v1482 = vsub.s32 0, %v1481
    %v1483 = vrot.slane %v1478, %v1482
    %v1485 = vld [vmem:[#allocation13] sm:$0xf]
    %v1486 = vld [vmem:[#allocation13 + $0x4] sm:$0xf]
    %v1487 = vld [vmem:[#allocation13 + $0x8] sm:$0xf]
    %v1488 = vld [vmem:[#allocation13 + $0xc] sm:$0xf]
    %v1489 = vld [vmem:[#allocation13 + $0x10] sm:$0xf]
    %v1490 = vld [vmem:[#allocation13 + $0x14] sm:$0xf]
    %v1491 = vld [vmem:[#allocation13 + $0x18] sm:$0xf]
    %v1492 = vld [vmem:[#allocation13 + $0x1c] sm:$0xf]
    %v1493 = vld [vmem:[%s12] sm:$0x1]
    %v1495 = vlaneseq
    %v1496 = vshrl.u32 %v1495, 7
    %v1497 = vsub.s32 0, %v1496
    %v1498 = vrot.slane %v1493, %v1497
    %v1500 = vpack.c.bf16 %v176, %v176
    %v1501 = vld [vmem:[%s6] sm:$0xf]
    %v1502 = vld [vmem:[%s6 + $0x4] sm:$0xf]
    %v1503 = vld [vmem:[%s8] sm:$0x1]
    %v1505 = vlaneseq
    %v1506 = vshrl.u32 %v1505, 7
    %v1507 = vsub.s32 0, %v1506
    %v1508 = vrot.slane %v1503, %v1507
    %v1511 = vrot.slane %v1500, 3
    %v1514 = vunpack.c.l.b16 %v1501
    %v1515 = vunpack.c.l.b16 %v1502
    %v1516 = vpack.c.b16 %v1515, %v1514
    %v1519 = vsel %vm193, %v1511, 0
    %1521 = vmatprep.subr.bf16.mxu0 0
    %1522 = vmatpush1.bf16.msra.mxu0 %v1516
    %1523 = vmatprep.subr.bf16.mxu0 0
    %1524 = vmatpush1.bf16.msra.mxu0 0
    %1525 = vmatprep.subr.bf16.mxu0 0
    %1526 = vmatpush1.bf16.msra.mxu0 0
    %1527 = vmatprep.subr.bf16.mxu0 0
    %1528 = vmatpush1.bf16.msra.mxu0 0
    %1529 = vmatprep.subr.bf16.mxu0 0
    %1530 = vmatpush1.bf16.msra.mxu0 0
    %1531 = vmatprep.subr.bf16.mxu0 0
    %1532 = vmatpush1.bf16.msra.mxu0 0
    %1533 = vmatprep.subr.bf16.mxu0 0
    %1534 = vmatpush1.bf16.msra.mxu0 0
    %1535 = vmatprep.subr.bf16.mxu0 0
    %1536 = vmatpush1.bf16.msra.mxu0 0
    %1537 = vmatprep.subr.bf16.mxu0 0
    %1538 = vmatpush1.bf16.msra.mxu0 0
    %1539 = vmatprep.subr.bf16.mxu0 0
    %1540 = vmatpush1.bf16.msra.mxu0 0
    %1541 = vmatprep.subr.bf16.mxu0 0
    %1542 = vmatpush1.bf16.msra.mxu0 0
    %1543 = vmatprep.subr.bf16.mxu0 0
    %1544 = vmatpush1.bf16.msra.mxu0 0
    %1545 = vmatprep.subr.bf16.mxu0 0
    %1546 = vmatpush1.bf16.msra.mxu0 0
    %1547 = vmatprep.subr.bf16.mxu0 0
    %1548 = vmatpush1.bf16.msra.mxu0 0
    %1549 = vmatprep.subr.bf16.mxu0 0
    %1550 = vmatpush1.bf16.msra.mxu0 0
    %1551 = vmatprep.subr.bf16.mxu0 0
    %1552 = vmatpush1.bf16.msra.mxu0 0
    %1553 = vmatprep.mubr.bf16.mxu0 0
    %1554 = vmatmul.mubr.bf16.gmra.mrb[0].mxu0 %v1519
    %v1555 = vpop.f32.mrb[0].mxu0
    %v1556 = vadd.f32 %v1508, %v1555
    %v1557 = vpop.f32.mrb[0].mxu0
    %v1558 = vpop.f32.mrb[0].mxu0
    %v1559 = vpop.f32.mrb[0].mxu0
    %1560 = vdwg.mxu0
    %v1561 = vpack.c.bf16 %v1388, %v1388
    %1563 = vrot.lane.b32.xlu0 %v1561, 32
    %v1564 = vpop.permute.xlu0 %1563
    %v1569 = vunpack.c.l.b16 %v1466
    %v1570 = vunpack.c.l.b16 %v1467
    %v1571 = vunpack.c.l.b16 %v1468
    %v1572 = vunpack.c.l.b16 %v1469
    %v1573 = vpack.c.b16 %v1570, %v1569
    %v1574 = vpack.c.b16 %v1572, %v1571
    %v1578 = vsel %vm250, %v1564, 0
    %1580 = vmatprep.subr.bf16.mxu0 0
    %1581 = vmatpush1.bf16.msra.mxu0 %v1573
    %1582 = vmatprep.subr.bf16.mxu0 0
    %1583 = vmatpush1.bf16.msra.mxu0 %v1574
    %1584 = vmatprep.subr.bf16.mxu0 0
    %1585 = vmatpush1.bf16.msra.mxu0 0
    %1586 = vmatprep.subr.bf16.mxu0 0
    %1587 = vmatpush1.bf16.msra.mxu0 0
    %1588 = vmatprep.subr.bf16.mxu0 0
    %1589 = vmatpush1.bf16.msra.mxu0 0
    %1590 = vmatprep.subr.bf16.mxu0 0
    %1591 = vmatpush1.bf16.msra.mxu0 0
    %1592 = vmatprep.subr.bf16.mxu0 0
    %1593 = vmatpush1.bf16.msra.mxu0 0
    %1594 = vmatprep.subr.bf16.mxu0 0
    %1595 = vmatpush1.bf16.msra.mxu0 0
    %1596 = vmatprep.subr.bf16.mxu0 0
    %1597 = vmatpush1.bf16.msra.mxu0 0
    %1598 = vmatprep.subr.bf16.mxu0 0
    %1599 = vmatpush1.bf16.msra.mxu0 0
    %1600 = vmatprep.subr.bf16.mxu0 0
    %1601 = vmatpush1.bf16.msra.mxu0 0
    %1602 = vmatprep.subr.bf16.mxu0 0
    %1603 = vmatpush1.bf16.msra.mxu0 0
    %1604 = vmatprep.subr.bf16.mxu0 0
    %1605 = vmatpush1.bf16.msra.mxu0 0
    %1606 = vmatprep.subr.bf16.mxu0 0
    %1607 = vmatpush1.bf16.msra.mxu0 0
    %1608 = vmatprep.subr.bf16.mxu0 0
    %1609 = vmatpush1.bf16.msra.mxu0 0
    %1610 = vmatprep.subr.bf16.mxu0 0
    %1611 = vmatpush1.bf16.msra.mxu0 0
    %1612 = vmatprep.mubr.bf16.mxu0 0
    %1613 = vmatmul.mubr.bf16.gmra.mrb[0].mxu0 %v1578
    %v1614 = vpop.f32.mrb[0].mxu0
    %v1615 = vadd.f32 %v1556, %v1614
    %v1616 = vpop.f32.mrb[0].mxu0
    %v1617 = vpop.f32.mrb[0].mxu0
    %v1618 = vpop.f32.mrb[0].mxu0
    %1619 = vdwg.mxu0
    %v1620 = vxor.u32 %v1615, 2147483648
    %v1621 = vmul.f32 %v1620, 1.442695
    %v1622 = vpow.pop %v1621
    %v1623 = vadd.f32 %v1622, 1.0
    %v1624 = vrcp.pop %v1623
    %v1625 = vmul.f32 1.0, %v1624
    %v1626 = vtanh.pop %v1615
    %v1627 = vmul.f32 %v1625, %v1382
    %1629 = vrot.lane.b32.xlu0 %v1626, 64
    %v1630 = vpop.permute.xlu0 %1629
    %v1632 = vmul.f32 %v1625, %v1630
    %1634 = vrot.lane.b32.xlu0 %v1632, 32
    %v1635 = vpop.permute.xlu0 %1634
    %v1637 = vadd.f32 %v1627, %v1635
    %v1638 = vtanh.pop %v1637
    %1640 = vrot.lane.b32.xlu0 %v1638, 64
    %v1641 = vpop.permute.xlu0 %1640
    %v1643 = vmul.f32 %v1625, %v1641
    %1645 = vrot.lane.b32.xlu0 %v1643, 32
    %v1646 = vpop.permute.xlu0 %1645
    %1649 = vrot.lane.b32.xlu0 %v1465, 64
    %v1650 = vpop.permute.xlu0 %1649
    %v1652 = vsel %vm250, %v1646, %v1650
    %v1653 = vpack.c.bf16 %v1652, %v1652
    %v1662 = vunpack.c.l.b16 %v1485
    %v1663 = vunpack.c.l.b16 %v1486
    %v1664 = vunpack.c.l.b16 %v1487
    %v1665 = vunpack.c.l.b16 %v1488
    %v1666 = vunpack.c.l.b16 %v1489
    %v1667 = vunpack.c.l.b16 %v1490
    %v1668 = vunpack.c.l.b16 %v1491
    %v1669 = vunpack.c.l.b16 %v1492
    %v1670 = vpack.c.b16 %v1663, %v1662
    %v1671 = vpack.c.b16 %v1665, %v1664
    %v1672 = vpack.c.b16 %v1667, %v1666
    %v1673 = vpack.c.b16 %v1669, %v1668
    %v1679 = vsel %vm348, %v1653, 0
    %1681 = vmatprep.subr.bf16.mxu0 0
    %1682 = vmatpush1.bf16.msra.mxu0 %v1670
    %1683 = vmatprep.subr.bf16.mxu0 0
    %1684 = vmatpush1.bf16.msra.mxu0 %v1671
    %1685 = vmatprep.subr.bf16.mxu0 0
    %1686 = vmatpush1.bf16.msra.mxu0 %v1672
    %1687 = vmatprep.subr.bf16.mxu0 0
    %1688 = vmatpush1.bf16.msra.mxu0 %v1673
    %1689 = vmatprep.subr.bf16.mxu0 0
    %1690 = vmatpush1.bf16.msra.mxu0 0
    %1691 = vmatprep.subr.bf16.mxu0 0
    %1692 = vmatpush1.bf16.msra.mxu0 0
    %1693 = vmatprep.subr.bf16.mxu0 0
    %1694 = vmatpush1.bf16.msra.mxu0 0
    %1695 = vmatprep.subr.bf16.mxu0 0
    %1696 = vmatpush1.bf16.msra.mxu0 0
    %1697 = vmatprep.subr.bf16.mxu0 0
    %1698 = vmatpush1.bf16.msra.mxu0 0
    %1699 = vmatprep.subr.bf16.mxu0 0
    %1700 = vmatpush1.bf16.msra.mxu0 0
    %1701 = vmatprep.subr.bf16.mxu0 0
    %1702 = vmatpush1.bf16.msra.mxu0 0
    %1703 = vmatprep.subr.bf16.mxu0 0
    %1704 = vmatpush1.bf16.msra.mxu0 0
    %1705 = vmatprep.subr.bf16.mxu0 0
    %1706 = vmatpush1.bf16.msra.mxu0 0
    %1707 = vmatprep.subr.bf16.mxu0 0
    %1708 = vmatpush1.bf16.msra.mxu0 0
    %1709 = vmatprep.subr.bf16.mxu0 0
    %1710 = vmatpush1.bf16.msra.mxu0 0
    %1711 = vmatprep.subr.bf16.mxu0 0
    %1712 = vmatpush1.bf16.msra.mxu0 0
    %1713 = vmatprep.mubr.bf16.mxu0 0
    %1714 = vmatmul.mubr.bf16.gmra.mrb[0].mxu0 %v1679
    %v1715 = vpop.f32.mrb[0].mxu0
    %v1716 = vadd.f32 %v1498, %v1715
    %v1717 = vpop.f32.mrb[0].mxu0
    %v1718 = vpop.f32.mrb[0].mxu0
    %v1719 = vpop.f32.mrb[0].mxu0
    %1720 = vdwg.mxu0
    %v1721 = vxor.u32 %v1716, 2147483648
    %v1722 = vmul.f32 %v1721, 1.442695
    %v1723 = vpow.pop %v1722
    %v1724 = vadd.f32 %v1723, 1.0
    %v1725 = vrcp.pop %v1724
    %v1726 = vmul.f32 1.0, %v1725
    %v1727 = vtanh.pop %v1716
    %v1728 = vmul.f32 %v1726, %v1459
    %1730 = vrot.lane.b32.xlu0 %v1727, 64
    %v1731 = vpop.permute.xlu0 %1730
    %v1733 = vmul.f32 %v1726, %v1731
    %1735 = vrot.lane.b32.xlu0 %v1733, 32
    %v1736 = vpop.permute.xlu0 %1735
    %v1738 = vadd.f32 %v1728, %v1736
    %v1739 = vtanh.pop %v1738
    %1741 = vrot.lane.b32.xlu0 %v1739, 64
    %v1742 = vpop.permute.xlu0 %1741
    %v1744 = vmul.f32 %v1726, %v1742
    %1746 = vrot.lane.b32.xlu0 %v1744, 32
    %v1747 = vpop.permute.xlu0 %1746
    %1749 = vrot.lane.b32.xlu0 %v1643, 64
    %v1750 = vpop.permute.xlu0 %1749
    %v1752 = vsel %vm250, %v1747, %v1750
    %v1753 = vpack.c.bf16 %v1752, %v1752
    %v1762 = vunpack.c.l.b16 %v1470
    %v1763 = vunpack.c.l.b16 %v1471
    %v1764 = vunpack.c.l.b16 %v1472
    %v1765 = vunpack.c.l.b16 %v1473
    %v1766 = vunpack.c.l.b16 %v1474
    %v1767 = vunpack.c.l.b16 %v1475
    %v1768 = vunpack.c.l.b16 %v1476
    %v1769 = vunpack.c.l.b16 %v1477
    %v1770 = vpack.c.b16 %v1763, %v1762
    %v1771 = vpack.c.b16 %v1765, %v1764
    %v1772 = vpack.c.b16 %v1767, %v1766
    %v1773 = vpack.c.b16 %v1769, %v1768
    %v1779 = vsel %vm348, %v1753, 0
    %1781 = vmatprep.subr.bf16.mxu0 0
    %1782 = vmatpush1.bf16.msra.mxu0 %v1770
    %1783 = vmatprep.subr.bf16.mxu0 0
    %1784 = vmatpush1.bf16.msra.mxu0 %v1771
    %1785 = vmatprep.subr.bf16.mxu0 0
    %1786 = vmatpush1.bf16.msra.mxu0 %v1772
    %1787 = vmatprep.subr.bf16.mxu0 0
    %1788 = vmatpush1.bf16.msra.mxu0 %v1773
    %1789 = vmatprep.subr.bf16.mxu0 0
    %1790 = vmatpush1.bf16.msra.mxu0 0
    %1791 = vmatprep.subr.bf16.mxu0 0
    %1792 = vmatpush1.bf16.msra.mxu0 0
    %1793 = vmatprep.subr.bf16.mxu0 0
    %1794 = vmatpush1.bf16.msra.mxu0 0
    %1795 = vmatprep.subr.bf16.mxu0 0
    %1796 = vmatpush1.bf16.msra.mxu0 0
    %1797 = vmatprep.subr.bf16.mxu0 0
    %1798 = vmatpush1.bf16.msra.mxu0 0
    %1799 = vmatprep.subr.bf16.mxu0 0
    %1800 = vmatpush1.bf16.msra.mxu0 0
    %1801 = vmatprep.subr.bf16.mxu0 0
    %1802 = vmatpush1.bf16.msra.mxu0 0
    %1803 = vmatprep.subr.bf16.mxu0 0
    %1804 = vmatpush1.bf16.msra.mxu0 0
    %1805 = vmatprep.subr.bf16.mxu0 0
    %1806 = vmatpush1.bf16.msra.mxu0 0
    %1807 = vmatprep.subr.bf16.mxu0 0
    %1808 = vmatpush1.bf16.msra.mxu0 0
    %1809 = vmatprep.subr.bf16.mxu0 0
    %1810 = vmatpush1.bf16.msra.mxu0 0
    %1811 = vmatprep.subr.bf16.mxu0 0
    %1812 = vmatpush1.bf16.msra.mxu0 0
    %1813 = vmatprep.mubr.bf16.mxu0 0
    %1814 = vmatmul.mubr.bf16.gmra.mrb[0].mxu0 %v1779
    %v1815 = vpop.f32.mrb[0].mxu0
    %v1816 = vadd.f32 %v1483, %v1815
    %v1817 = vpop.f32.mrb[0].mxu0
    %v1818 = vpop.f32.mrb[0].mxu0
    %v1819 = vpop.f32.mrb[0].mxu0
    %1820 = vdwg.mxu0
    %v1821 = vxor.u32 %v1816, 2147483648
    %v1822 = vmul.f32 %v1821, 1.442695
    %v1823 = vpow.pop %v1822
    %v1824 = vadd.f32 %v1823, 1.0
    %v1825 = vrcp.pop %v1824
    %v1826 = vmul.f32 1.0, %v1825
    %v1827 = vtanh.pop %v1816
    %v1828 = vmul.f32 %v1826, %v1637
    %1830 = vrot.lane.b32.xlu0 %v1827, 64
    %v1831 = vpop.permute.xlu0 %1830
    %v1833 = vmul.f32 %v1826, %v1831
    %1835 = vrot.lane.b32.xlu0 %v1833, 32
    %v1836 = vpop.permute.xlu0 %1835
    %v1838 = vadd.f32 %v1828, %v1836
    %v1839 = vtanh.pop %v1838
    %1841 = vrot.lane.b32.xlu0 %v1839, 64
    %v1842 = vpop.permute.xlu0 %1841
    %v1844 = vmul.f32 %v1826, %v1842
    %1846 = vrot.lane.b32.xlu0 %v1844, 32
    %v1847 = vpop.permute.xlu0 %1846
    %1849 = vrot.lane.b32.xlu0 %v1744, 64
    %v1850 = vpop.permute.xlu0 %1849
    %v1852 = vsel %vm250, %v1847, %v1850
    %v1853 = vpack.c.bf16 %v1852, %v1852
    %v1855 = vsel %vm348, %v1853, 0
    %1857 = vmatprep.subr.bf16.mxu0 0
    %1858 = vmatpush1.bf16.msra.mxu0 %v1670
    %1859 = vmatprep.subr.bf16.mxu0 0
    %1860 = vmatpush1.bf16.msra.mxu0 %v1671
    %1861 = vmatprep.subr.bf16.mxu0 0
    %1862 = vmatpush1.bf16.msra.mxu0 %v1672
    %1863 = vmatprep.subr.bf16.mxu0 0
    %1864 = vmatpush1.bf16.msra.mxu0 %v1673
    %1865 = vmatprep.subr.bf16.mxu0 0
    %1866 = vmatpush1.bf16.msra.mxu0 0
    %1867 = vmatprep.subr.bf16.mxu0 0
    %1868 = vmatpush1.bf16.msra.mxu0 0
    %1869 = vmatprep.subr.bf16.mxu0 0
    %1870 = vmatpush1.bf16.msra.mxu0 0
    %1871 = vmatprep.subr.bf16.mxu0 0
    %1872 = vmatpush1.bf16.msra.mxu0 0
    %1873 = vmatprep.subr.bf16.mxu0 0
    %1874 = vmatpush1.bf16.msra.mxu0 0
    %1875 = vmatprep.subr.bf16.mxu0 0
    %1876 = vmatpush1.bf16.msra.mxu0 0
    %1877 = vmatprep.subr.bf16.mxu0 0
    %1878 = vmatpush1.bf16.msra.mxu0 0
    %1879 = vmatprep.subr.bf16.mxu0 0
    %1880 = vmatpush1.bf16.msra.mxu0 0
    %1881 = vmatprep.subr.bf16.mxu0 0
    %1882 = vmatpush1.bf16.msra.mxu0 0
    %1883 = vmatprep.subr.bf16.mxu0 0
    %1884 = vmatpush1.bf16.msra.mxu0 0
    %1885 = vmatprep.subr.bf16.mxu0 0
    %1886 = vmatpush1.bf16.msra.mxu0 0
    %1887 = vmatprep.subr.bf16.mxu0 0
    %1888 = vmatpush1.bf16.msra.mxu0 0
    %1889 = vmatprep.mubr.bf16.mxu0 0
    %1890 = vmatmul.mubr.bf16.gmra.mrb[0].mxu0 %v1855
    %v1891 = vpop.f32.mrb[0].mxu0
    %v1892 = vadd.f32 %v1498, %v1891
    %v1893 = vpop.f32.mrb[0].mxu0
    %v1894 = vpop.f32.mrb[0].mxu0
    %v1895 = vpop.f32.mrb[0].mxu0
    %1896 = vdwg.mxu0
    %v1897 = vxor.u32 %v1892, 2147483648
    %v1898 = vmul.f32 %v1897, 1.442695
    %v1899 = vpow.pop %v1898
    %v1900 = vadd.f32 %v1899, 1.0
    %v1901 = vrcp.pop %v1900
    %v1902 = vmul.f32 1.0, %v1901
    %v1903 = vtanh.pop %v1892
    %v1904 = vmul.f32 %v1902, %v1738
    %1906 = vrot.lane.b32.xlu0 %v1903, 64
    %v1907 = vpop.permute.xlu0 %1906
    %v1909 = vmul.f32 %v1902, %v1907
    %1911 = vrot.lane.b32.xlu0 %v1909, 32
    %v1912 = vpop.permute.xlu0 %1911
    %v1914 = vadd.f32 %v1904, %v1912
    %v1915 = vtanh.pop %v1914
    %1917 = vrot.lane.b32.xlu0 %v1915, 64
    %v1918 = vpop.permute.xlu0 %1917
    %v1920 = vmul.f32 %v1902, %v1918
    %1922 = vrot.lane.b32.xlu0 %v1920, 32
    %v1923 = vpop.permute.xlu0 %1922
    %1925 = vrot.lane.b32.xlu0 %v1844, 64
    %v1926 = vpop.permute.xlu0 %1925
    %v1928 = vsel %vm250, %v1923, %v1926
    %v1929 = vpack.c.bf16 %v1928, %v1928
    %v1931 = vsel %vm348, %v1929, 0
    %1933 = vmatprep.subr.bf16.mxu0 0
    %1934 = vmatpush1.bf16.msra.mxu0 %v1770
    %1935 = vmatprep.subr.bf16.mxu0 0
    %1936 = vmatpush1.bf16.msra.mxu0 %v1771
    %1937 = vmatprep.subr.bf16.mxu0 0
    %1938 = vmatpush1.bf16.msra.mxu0 %v1772
    %1939 = vmatprep.subr.bf16.mxu0 0
    %1940 = vmatpush1.bf16.msra.mxu0 %v1773
    %1941 = vmatprep.subr.bf16.mxu0 0
    %1942 = vmatpush1.bf16.msra.mxu0 0
    %1943 = vmatprep.subr.bf16.mxu0 0
    %1944 = vmatpush1.bf16.msra.mxu0 0
    %1945 = vmatprep.subr.bf16.mxu0 0
    %1946 = vmatpush1.bf16.msra.mxu0 0
    %1947 = vmatprep.subr.bf16.mxu0 0
    %1948 = vmatpush1.bf16.msra.mxu0 0
    %1949 = vmatprep.subr.bf16.mxu0 0
    %1950 = vmatpush1.bf16.msra.mxu0 0
    %1951 = vmatprep.subr.bf16.mxu0 0
    %1952 = vmatpush1.bf16.msra.mxu0 0
    %1953 = vmatprep.subr.bf16.mxu0 0
    %1954 = vmatpush1.bf16.msra.mxu0 0
    %1955 = vmatprep.subr.bf16.mxu0 0
    %1956 = vmatpush1.bf16.msra.mxu0 0
    %1957 = vmatprep.subr.bf16.mxu0 0
    %1958 = vmatpush1.bf16.msra.mxu0 0
    %1959 = vmatprep.subr.bf16.mxu0 0
    %1960 = vmatpush1.bf16.msra.mxu0 0
    %1961 = vmatprep.subr.bf16.mxu0 0
    %1962 = vmatpush1.bf16.msra.mxu0 0
    %1963 = vmatprep.subr.bf16.mxu0 0
    %1964 = vmatpush1.bf16.msra.mxu0 0
    %1965 = vmatprep.mubr.bf16.mxu0 0
    %1966 = vmatmul.mubr.bf16.gmra.mrb[0].mxu0 %v1931
    %v1967 = vpop.f32.mrb[0].mxu0
    %v1968 = vadd.f32 %v1483, %v1967
    %v1969 = vpop.f32.mrb[0].mxu0
    %v1970 = vpop.f32.mrb[0].mxu0
    %v1971 = vpop.f32.mrb[0].mxu0
    %1972 = vdwg.mxu0
    %v1973 = vxor.u32 %v1968, 2147483648
    %v1974 = vmul.f32 %v1973, 1.442695
    %v1975 = vpow.pop %v1974
    %v1976 = vadd.f32 %v1975, 1.0
    %v1977 = vrcp.pop %v1976
    %v1978 = vmul.f32 1.0, %v1977
    %v1979 = vtanh.pop %v1968
    %v1980 = vmul.f32 %v1978, %v1838
    %1982 = vrot.lane.b32.xlu0 %v1979, 64
    %v1983 = vpop.permute.xlu0 %1982
    %v1985 = vmul.f32 %v1978, %v1983
    %1987 = vrot.lane.b32.xlu0 %v1985, 32
    %v1988 = vpop.permute.xlu0 %1987
    %v1990 = vadd.f32 %v1980, %v1988
    %v1991 = vtanh.pop %v1990
    %1993 = vrot.lane.b32.xlu0 %v1991, 64
    %v1994 = vpop.permute.xlu0 %1993
    %v1996 = vmul.f32 %v1978, %v1994
    %1998 = vrot.lane.b32.xlu0 %v1996, 32
    %v1999 = vpop.permute.xlu0 %1998
    %2001 = vrot.lane.b32.xlu0 %v1920, 64
    %v2002 = vpop.permute.xlu0 %2001
    %v2004 = vsel %vm250, %v1999, %v2002
    %v2005 = vpack.c.bf16 %v2004, %v2004
    %v2007 = vsel %vm348, %v2005, 0
    %2009 = vmatprep.subr.bf16.mxu0 0
    %2010 = vmatpush1.bf16.msra.mxu0 %v1670
    %2011 = vmatprep.subr.bf16.mxu0 0
    %2012 = vmatpush1.bf16.msra.mxu0 %v1671
    %2013 = vmatprep.subr.bf16.mxu0 0
    %2014 = vmatpush1.bf16.msra.mxu0 %v1672
    %2015 = vmatprep.subr.bf16.mxu0 0
    %2016 = vmatpush1.bf16.msra.mxu0 %v1673
    %2017 = vmatprep.subr.bf16.mxu0 0
    %2018 = vmatpush1.bf16.msra.mxu0 0
    %2019 = vmatprep.subr.bf16.mxu0 0
    %2020 = vmatpush1.bf16.msra.mxu0 0
    %2021 = vmatprep.subr.bf16.mxu0 0
    %2022 = vmatpush1.bf16.msra.mxu0 0
    %2023 = vmatprep.subr.bf16.mxu0 0
    %2024 = vmatpush1.bf16.msra.mxu0 0
    %2025 = vmatprep.subr.bf16.mxu0 0
    %2026 = vmatpush1.bf16.msra.mxu0 0
    %2027 = vmatprep.subr.bf16.mxu0 0
    %2028 = vmatpush1.bf16.msra.mxu0 0
    %2029 = vmatprep.subr.bf16.mxu0 0
    %2030 = vmatpush1.bf16.msra.mxu0 0
    %2031 = vmatprep.subr.bf16.mxu0 0
    %2032 = vmatpush1.bf16.msra.mxu0 0
    %2033 = vmatprep.subr.bf16.mxu0 0
    %2034 = vmatpush1.bf16.msra.mxu0 0
    %2035 = vmatprep.subr.bf16.mxu0 0
    %2036 = vmatpush1.bf16.msra.mxu0 0
    %2037 = vmatprep.subr.bf16.mxu0 0
    %2038 = vmatpush1.bf16.msra.mxu0 0
    %2039 = vmatprep.subr.bf16.mxu0 0
    %2040 = vmatpush1.bf16.msra.mxu0 0
    %2041 = vmatprep.mubr.bf16.mxu0 0
    %2042 = vmatmul.mubr.bf16.gmra.mrb[0].mxu0 %v2007
    %v2043 = vpop.f32.mrb[0].mxu0
    %v2044 = vadd.f32 %v1498, %v2043
    %v2045 = vpop.f32.mrb[0].mxu0
    %v2046 = vpop.f32.mrb[0].mxu0
    %v2047 = vpop.f32.mrb[0].mxu0
    %2048 = vdwg.mxu0
    %v2049 = vxor.u32 %v2044, 2147483648
    %v2050 = vmul.f32 %v2049, 1.442695
    %v2051 = vpow.pop %v2050
    %v2052 = vadd.f32 %v2051, 1.0
    %v2053 = vrcp.pop %v2052
    %v2054 = vmul.f32 1.0, %v2053
    %v2055 = vtanh.pop %v2044
    %v2056 = vmul.f32 %v2054, %v1914
    %2058 = vrot.lane.b32.xlu0 %v2055, 64
    %v2059 = vpop.permute.xlu0 %2058
    %v2061 = vmul.f32 %v2054, %v2059
    %2063 = vrot.lane.b32.xlu0 %v2061, 32
    %v2064 = vpop.permute.xlu0 %2063
    %v2066 = vadd.f32 %v2056, %v2064
    %v2067 = vtanh.pop %v2066
    %2069 = vrot.lane.b32.xlu0 %v2067, 64
    %v2070 = vpop.permute.xlu0 %2069
    %v2072 = vmul.f32 %v2054, %v2070
    %2074 = vrot.lane.b32.xlu0 %v2072, 32
    %v2075 = vpop.permute.xlu0 %2074
    %2077 = vrot.lane.b32.xlu0 %v1996, 64
    %v2078 = vpop.permute.xlu0 %2077
    %v2080 = vsel %vm250, %v2075, %v2078
    %v2081 = vpack.c.bf16 %v2080, %v2080
    %v2083 = vsel %vm348, %v2081, 0
    %2085 = vmatprep.subr.bf16.mxu0 0
    %2086 = vmatpush1.bf16.msra.mxu0 %v1770
    %2087 = vmatprep.subr.bf16.mxu0 0
    %2088 = vmatpush1.bf16.msra.mxu0 %v1771
    %2089 = vmatprep.subr.bf16.mxu0 0
    %2090 = vmatpush1.bf16.msra.mxu0 %v1772
    %2091 = vmatprep.subr.bf16.mxu0 0
    %2092 = vmatpush1.bf16.msra.mxu0 %v1773
    %2093 = vmatprep.subr.bf16.mxu0 0
    %2094 = vmatpush1.bf16.msra.mxu0 0
    %2095 = vmatprep.subr.bf16.mxu0 0
    %2096 = vmatpush1.bf16.msra.mxu0 0
    %2097 = vmatprep.subr.bf16.mxu0 0
    %2098 = vmatpush1.bf16.msra.mxu0 0
    %2099 = vmatprep.subr.bf16.mxu0 0
    %2100 = vmatpush1.bf16.msra.mxu0 0
    %2101 = vmatprep.subr.bf16.mxu0 0
    %2102 = vmatpush1.bf16.msra.mxu0 0
    %2103 = vmatprep.subr.bf16.mxu0 0
    %2104 = vmatpush1.bf16.msra.mxu0 0
    %2105 = vmatprep.subr.bf16.mxu0 0
    %2106 = vmatpush1.bf16.msra.mxu0 0
    %2107 = vmatprep.subr.bf16.mxu0 0
    %2108 = vmatpush1.bf16.msra.mxu0 0
    %2109 = vmatprep.subr.bf16.mxu0 0
    %2110 = vmatpush1.bf16.msra.mxu0 0
    %2111 = vmatprep.subr.bf16.mxu0 0
    %2112 = vmatpush1.bf16.msra.mxu0 0
    %2113 = vmatprep.subr.bf16.mxu0 0
    %2114 = vmatpush1.bf16.msra.mxu0 0
    %2115 = vmatprep.subr.bf16.mxu0 0
    %2116 = vmatpush1.bf16.msra.mxu0 0
    %2117 = vmatprep.mubr.bf16.mxu0 0
    %2118 = vmatmul.mubr.bf16.gmra.mrb[0].mxu0 %v2083
    %v2119 = vpop.f32.mrb[0].mxu0
    %v2120 = vadd.f32 %v1483, %v2119
    %v2121 = vpop.f32.mrb[0].mxu0
    %v2122 = vpop.f32.mrb[0].mxu0
    %v2123 = vpop.f32.mrb[0].mxu0
    %2124 = vdwg.mxu0
    %v2125 = vxor.u32 %v2120, 2147483648
    %v2126 = vmul.f32 %v2125, 1.442695
    %v2127 = vpow.pop %v2126
    %v2128 = vadd.f32 %v2127, 1.0
    %v2129 = vrcp.pop %v2128
    %v2130 = vmul.f32 1.0, %v2129
    %v2131 = vtanh.pop %v2120
    %v2132 = vmul.f32 %v2130, %v1990
    %2134 = vrot.lane.b32.xlu0 %v2131, 64
    %v2135 = vpop.permute.xlu0 %2134
    %v2137 = vmul.f32 %v2130, %v2135
    %2139 = vrot.lane.b32.xlu0 %v2137, 32
    %v2140 = vpop.permute.xlu0 %2139
    %v2142 = vadd.f32 %v2132, %v2140
    %v2143 = vtanh.pop %v2142
    %2145 = vrot.lane.b32.xlu0 %v2143, 64
    %v2146 = vpop.permute.xlu0 %2145
    %v2148 = vmul.f32 %v2130, %v2146
    %2150 = vrot.lane.b32.xlu0 %v2148, 32
    %v2151 = vpop.permute.xlu0 %2150
    %2153 = vrot.lane.b32.xlu0 %v2072, 64
    %v2154 = vpop.permute.xlu0 %2153
    %v2156 = vsel %vm250, %v2151, %v2154
    %v2157 = vpack.c.bf16 %v2156, %v2156
    %v2159 = vsel %vm348, %v2157, 0
    %2161 = vmatprep.subr.bf16.mxu0 0
    %2162 = vmatpush1.bf16.msra.mxu0 %v1670
    %2163 = vmatprep.subr.bf16.mxu0 0
    %2164 = vmatpush1.bf16.msra.mxu0 %v1671
    %2165 = vmatprep.subr.bf16.mxu0 0
    %2166 = vmatpush1.bf16.msra.mxu0 %v1672
    %2167 = vmatprep.subr.bf16.mxu0 0
    %2168 = vmatpush1.bf16.msra.mxu0 %v1673
    %2169 = vmatprep.subr.bf16.mxu0 0
    %2170 = vmatpush1.bf16.msra.mxu0 0
    %2171 = vmatprep.subr.bf16.mxu0 0
    %2172 = vmatpush1.bf16.msra.mxu0 0
    %2173 = vmatprep.subr.bf16.mxu0 0
    %2174 = vmatpush1.bf16.msra.mxu0 0
    %2175 = vmatprep.subr.bf16.mxu0 0
    %2176 = vmatpush1.bf16.msra.mxu0 0
    %2177 = vmatprep.subr.bf16.mxu0 0
    %2178 = vmatpush1.bf16.msra.mxu0 0
    %2179 = vmatprep.subr.bf16.mxu0 0
    %2180 = vmatpush1.bf16.msra.mxu0 0
    %2181 = vmatprep.subr.bf16.mxu0 0
    %2182 = vmatpush1.bf16.msra.mxu0 0
    %2183 = vmatprep.subr.bf16.mxu0 0
    %2184 = vmatpush1.bf16.msra.mxu0 0
    %2185 = vmatprep.subr.bf16.mxu0 0
    %2186 = vmatpush1.bf16.msra.mxu0 0
    %2187 = vmatprep.subr.bf16.mxu0 0
    %2188 = vmatpush1.bf16.msra.mxu0 0
    %2189 = vmatprep.subr.bf16.mxu0 0
    %2190 = vmatpush1.bf16.msra.mxu0 0
    %2191 = vmatprep.subr.bf16.mxu0 0
    %2192 = vmatpush1.bf16.msra.mxu0 0
    %2193 = vmatprep.mubr.bf16.mxu0 0
    %2194 = vmatmul.mubr.bf16.gmra.mrb[0].mxu0 %v2159
    %v2195 = vpop.f32.mrb[0].mxu0
    %v2196 = vadd.f32 %v1498, %v2195
    %v2197 = vpop.f32.mrb[0].mxu0
    %v2198 = vpop.f32.mrb[0].mxu0
    %v2199 = vpop.f32.mrb[0].mxu0
    %2200 = vdwg.mxu0
    %v2201 = vxor.u32 %v2196, 2147483648
    %v2202 = vmul.f32 %v2201, 1.442695
    %v2203 = vpow.pop %v2202
    %v2204 = vadd.f32 %v2203, 1.0
    %v2205 = vrcp.pop %v2204
    %v2206 = vmul.f32 1.0, %v2205
    %v2207 = vtanh.pop %v2196
    %v2208 = vmul.f32 %v2206, %v2066
    %2210 = vrot.lane.b32.xlu0 %v2207, 64
    %v2211 = vpop.permute.xlu0 %2210
    %v2213 = vmul.f32 %v2206, %v2211
    %2215 = vrot.lane.b32.xlu0 %v2213, 32
    %v2216 = vpop.permute.xlu0 %2215
    %v2218 = vadd.f32 %v2208, %v2216
    %v2219 = vtanh.pop %v2218
    %2221 = vrot.lane.b32.xlu0 %v2219, 64
    %v2222 = vpop.permute.xlu0 %2221
    %v2224 = vmul.f32 %v2206, %v2222
    %v2225 = vrot.slane %v1920, 6
    %v2227 = vrot.slane %v2072, 4
    %v2230 = vrot.slane %v2224, 2
    %vm2232 = vcmask 1041408
    %v2233 = vsel %vm2232, %v1744, %v2225
    %vm2234 = vcmask 1043456
    %v2235 = vsel %vm2234, %v2233, %v2227
    %vm2236 = vcmask 1045504
    %v2237 = vsel %vm2236, %v2235, %v2230
    %v2238 = vpack.c.bf16 %v2237, %v2237
    %v2239 = vld [vmem:[%s13] sm:$0xf]
    %v2240 = vld [vmem:[%s13 + $0x4] sm:$0xf]
    %v2241 = vld [vmem:[%s13 + $0x8] sm:$0xf]
    %v2242 = vld [vmem:[%s13 + $0xc] sm:$0xf]
    %v2243 = vld [vmem:[%s14] sm:$0x1]
    %v2245 = vlaneseq
    %v2246 = vshrl.u32 %v2245, 7
    %v2247 = vsub.s32 0, %v2246
    %v2248 = vrot.slane %v2243, %v2247
    %2251 = vrot.lane.b32.xlu0 %v2238, 32
    %v2252 = vpop.permute.xlu0 %2251
    %v2257 = vunpack.c.l.b16 %v2239
    %v2258 = vunpack.c.l.b16 %v2240
    %v2259 = vunpack.c.l.b16 %v2241
    %v2260 = vunpack.c.l.b16 %v2242
    %v2261 = vpack.c.b16 %v2258, %v2257
    %v2262 = vpack.c.b16 %v2260, %v2259
    %v2266 = vsel %vm250, %v2252, 0
    %2268 = vmatprep.subr.bf16.mxu0 0
    %2269 = vmatpush1.bf16.msra.mxu0 %v2261
    %2270 = vmatprep.subr.bf16.mxu0 0
    %2271 = vmatpush1.bf16.msra.mxu0 %v2262
    %2272 = vmatprep.subr.bf16.mxu0 0
    %2273 = vmatpush1.bf16.msra.mxu0 0
    %2274 = vmatprep.subr.bf16.mxu0 0
    %2275 = vmatpush1.bf16.msra.mxu0 0
    %2276 = vmatprep.subr.bf16.mxu0 0
    %2277 = vmatpush1.bf16.msra.mxu0 0
    %2278 = vmatprep.subr.bf16.mxu0 0
    %2279 = vmatpush1.bf16.msra.mxu0 0
    %2280 = vmatprep.subr.bf16.mxu0 0
    %2281 = vmatpush1.bf16.msra.mxu0 0
    %2282 = vmatprep.subr.bf16.mxu0 0
    %2283 = vmatpush1.bf16.msra.mxu0 0
    %2284 = vmatprep.subr.bf16.mxu0 0
    %2285 = vmatpush1.bf16.msra.mxu0 0
    %2286 = vmatprep.subr.bf16.mxu0 0
    %2287 = vmatpush1.bf16.msra.mxu0 0
    %2288 = vmatprep.subr.bf16.mxu0 0
    %2289 = vmatpush1.bf16.msra.mxu0 0
    %2290 = vmatprep.subr.bf16.mxu0 0
    %2291 = vmatpush1.bf16.msra.mxu0 0
    %2292 = vmatprep.subr.bf16.mxu0 0
    %2293 = vmatpush1.bf16.msra.mxu0 0
    %2294 = vmatprep.subr.bf16.mxu0 0
    %2295 = vmatpush1.bf16.msra.mxu0 0
    %2296 = vmatprep.subr.bf16.mxu0 0
    %2297 = vmatpush1.bf16.msra.mxu0 0
    %2298 = vmatprep.subr.bf16.mxu0 0
    %2299 = vmatpush1.bf16.msra.mxu0 0
    %2300 = vmatprep.mubr.bf16.mxu0 0
    %2301 = vmatmul.mubr.bf16.gmra.mrb[0].mxu0 %v2266
    %v2302 = vpop.f32.mrb[0].mxu0
    %v2303 = vadd.f32 %v2248, %v2302
    %v2304 = vpop.f32.mrb[0].mxu0
    %v2305 = vpop.f32.mrb[0].mxu0
    %v2306 = vpop.f32.mrb[0].mxu0
    %2307 = vdwg.mxu0
    %vm2308 = vcmask 31744
    %2309 = vst.msk [vmem:[%s15] sm:$0xff] %vm2308, %v2303
    // Predicated region
    $region94: #{tpu_custom_call.1} parent=1 // pred_check
      _
    $region95: #{tpu_custom_call.1} parent=1 // pred_check_branch
      %2311 = sbr.rel (0) target = $region97
    $region96: #{tpu_custom_call.1} parent=1 // pred_region
      _
    $region97: #{tpu_custom_call.1} parent=1 // pred_fallthru
      _
    // Predicated region
    $region98: #{tpu_custom_call.1} parent=1 // pred_check
      _
    $region99: #{tpu_custom_call.1} parent=1 // pred_check_branch
      %2313 = sbr.rel (0) target = $region101
    $region100: #{tpu_custom_call.1} parent=1 // pred_region
      _
    $region101: #{tpu_custom_call.1} parent=1 // pred_fallthru
      _
    %2314 = vsyncpa [#allocation3], 1
    %2315 = vsyncpa [#allocation5], 1
    %2316 = vsyncpa [#allocation8], 1
    %2317 = vsyncpa [#allocation11], 1
    %2318 = vsyncpa [#allocation14], 1

</llo_original>
